<compile_context>
chip_gen: v6e
topology: v6e:2x2x1
jax: 0.10.0
libtpu: 0.0.40
codegen_flags: <defaults>
</compile_context>

<pallas_src>
import math
from functools import partial

import jax
import jax.numpy as jnp
from jax.experimental import pallas as pl
from jax.experimental.pallas import tpu as pltpu

_A1, _A2, _A3, _A4, _A5 = 0.254829592, -0.284496736, 1.421413741, -1.453152027, 1.061405429
_P = 0.3275911
_INV_SQRT2 = 1.0 / math.sqrt(2.0)

_SLACK = 8                               # zero slack rows above/below each flattened halo tile
_VMEM_TILE_BUDGET = 40 * 1024 * 1024     # per-step working-set cap (safe on v7x's 64 MiB VMEM)


def _gelu_exact(x):
    """Exact (erf) GELU as in nn.GELU(); erf via A&S 7.1.26 (max abs err ~1.5e-7).

    Divide = EUP approximate reciprocal + one Newton step (exp also rides the EUP slot).
    The Newton step is the first thing to cut if the block ever becomes VALU-bound; it is
    free today because the kernel is HBM-bound, and it keeps the demo asserts tight.
    """
    u = x * _INV_SQRT2
    s = jnp.where(u >= 0.0, 1.0, -1.0)
    au = jnp.abs(u)
    d = 1.0 + _P * au
    r = pl.reciprocal(d, approx=True)
    t = r * (2.0 - d * r)                      # one Newton step -> ~f32-accurate 1/d
    poly = ((((_A5 * t + _A4) * t + _A3) * t + _A2) * t + _A1) * t
    erf_u = s * (1.0 - poly * jnp.exp(-au * au))
    return 0.5 * x * (1.0 + erf_u)


def _fasternet_block_kernel(halo_ref, x_ref, wc1_ref, w2a_ref, w2b_ref, b2_ref, w3_ref,
                            out_ref, *, width, cp, slice_pass):
    tpix = out_ref.shape[0]
    x_f32 = x_ref[...]                          # (tpix, C) f32: residual + pass-through source
    x_b16 = x_f32.astype(jnp.bfloat16)

    # --- conv1: PConv2d(split_cat) 3x3 on the cp partial channels (in-kernel, 9 dots) ---
    # halo_ref is the row-padded, row-flattened partial-channel slab for this row tile:
    # output row q reads halo rows _SLACK + q + dh*width + dw (dh in 0..2, dw in -1..1).
    # Taps that would cross the left/right image edge wrap into the neighbouring row of
    # the flattened layout; those output rows are masked to zero, which is exactly the
    # conv's zero padding.  Everything stays 2-D: row slices, 2-D dots, row masks.
    col = jax.lax.broadcasted_iota(jnp.int32, (tpix, 1), 0) % width
    acc = jnp.zeros((tpix, cp), jnp.float32)
    for dw in (-1, 0, 1):
        part = jnp.zeros((tpix, cp), jnp.float32)
        for dh in range(3):
            start = _SLACK + dh * width + dw                      # static offset
            tap = halo_ref[pl.ds(start, tpix), :]                 # (tpix, cp) bf16
            part = part + jnp.dot(tap, wc1_ref[dh * 3 + dw + 1],  # tap t = kh*3 + kw
                                  preferred_element_type=jnp.float32)
        if dw == -1:
            part = jnp.where(col == 0, 0.0, part)
        elif dw == 1:
            part = jnp.where(col == width - 1, 0.0, part)
        acc = acc + part
    y1 = acc.astype(jnp.bfloat16)                                 # (tpix, cp)

    # --- conv2: 1x1 conv with folded BatchNorm, then exact GELU -------------------------
    h = jnp.dot(y1, w2a_ref[...], preferred_element_type=jnp.float32)
    if slice_pass:
        # cp is a 128-lane multiple: slice pass-through channels (no wasted MXU work).
        h = h + jnp.dot(x_b16[:, cp:], w2b_ref[...], preferred_element_type=jnp.float32)
    else:
        # w2b's first cp rows are exactly zero -> pass-through without a lane relayout;
        # no extra HBM traffic (x is already resident for the residual).
        h = h + jnp.dot(x_b16, w2b_ref[...], preferred_element_type=jnp.float32)
    h = _gelu_exact(h + b2_ref[...])            # bias fused into the GELU input, f32 VPU math

    # --- conv3: 1x1, no bias; residual add (DropPath(0.0) == Identity), exact f32 -------
    z = jnp.dot(h.astype(jnp.bfloat16), w3_ref[...], preferred_element_type=jnp.float32)
    out_ref[...] = x_f32 + z


def _per_step_vmem_bytes(th, W, C, cp, inner, w2b_rows):
    tpix = th * W
    p2 = 2 * _SLACK + (th + 2) * W
    io = p2 * cp * 2 + tpix * C * 4 + tpix * C * 4            # halo(bf16) + x(f32) + out(f32)
    weights = (9 * cp * cp + cp * inner + w2b_rows * inner + inner * C) * 2 + inner * 4
    return 2 * (io + weights)       # conservatively assume everything is double-buffered


def _choose_row_tile(N, H, W, C, cp, inner, w2b_rows, block_pixels):
    """Largest H-divisor row tile fitting the pixel target and the VMEM budget, then
    shrunk (if divisors allow) so the parallel grid has >= 8 steps (v7x: 2 TCs)."""
    divs = [d for d in range(1, H + 1) if H % d == 0 and (d * W) % 8 == 0]
    if not divs:
        divs = [H]
    fit = [d for d in divs if d * W <= block_pixels
           and _per_step_vmem_bytes(d, W, C, cp, inner, w2b_rows) <= _VMEM_TILE_BUDGET]
    th = max(fit) if fit else min(divs)
    for d in sorted(divs, reverse=True):
        if d <= th and N * (H // d) >= 8:
            th = d
            break
    return th


@partial(jax.jit, static_argnames=("n_div", "block_pixels"))
def fasternet_block(x_nhwc, wpc_hwio, w2_mat, b2_vec, w3_mat, *, n_div=4,
                    block_pixels=4096):
    """x_nhwc: (N,H,W,C) f32.  wpc_hwio: (3,3,cp,cp).  w2_mat: (C,inner) BN-folded.
    b2_vec: (inner,).  w3_mat: (inner,C)."""
    N, H, W, C = x_nhwc.shape
    cp = C // n_div
    inner = w2_mat.shape[1]
    M = N * H * W

    slice_pass = (cp % 128 == 0) and cp < C
    w2b_rows = (C - cp) if slice_pass else C

    th = _choose_row_tile(N, H, W, C, cp, inner, w2b_rows, block_pixels)
    assert H % th == 0
    tpix = th * W
    assert tpix % 8 == 0, f"row-tile pixel count {tpix} must be a multiple of 8 (H={H}, W={W})"
    n_tiles = H // th
    G = N * n_tiles
    P2 = 2 * _SLACK + (th + 2) * W

    # Halo tiles of the *partial* channels only (bf16): pad H by 1, cut overlapping
    # (th+2)-row tiles, flatten rows, add _SLACK zero rows of slack on each side.
    # This replaces v2's full (M, 9*cp) im2col round-trip through HBM.
    xpart = x_nhwc[..., :cp].astype(jnp.bfloat16)                   # (N, H,   W, cp)
    xpad = jnp.pad(xpart, ((0, 0), (1, 1), (0, 0), (0, 0)))         # (N, H+2, W, cp)
    tiles = [xpad[:, i * th:i * th + th + 2] for i in range(n_tiles)]
    halo = jnp.stack(tiles, axis=1).reshape(G, (th + 2) * W, cp)
    halo = jnp.pad(halo, ((0, 0), (_SLACK, _SLACK), (0, 0)))        # (G, P2, cp)

    x_flat = x_nhwc.reshape(M, C)                                   # free reshape, f32

    # Weights: bf16 MXU operands (f32 accumulation inside the kernel).
    wc1 = wpc_hwio.reshape(9, cp, cp).astype(jnp.bfloat16)          # tap t = kh*3 + kw
    w2a = w2_mat[:cp].astype(jnp.bfloat16)                          # (cp, inner)
    if slice_pass:
        w2b = w2_mat[cp:].astype(jnp.bfloat16)                      # (C-cp, inner)
    else:
        w2b = jnp.zeros_like(w2_mat).at[cp:].set(w2_mat[cp:]).astype(jnp.bfloat16)  # (C, inner)
    w3 = w3_mat.astype(jnp.bfloat16)                                # (inner, C)
    b2 = b2_vec.reshape(1, inner).astype(jnp.float32)

    vmem_need = _per_step_vmem_bytes(th, W, C, cp, inner, w2b_rows)
    vmem_limit = int(min(48 * 1024 * 1024, max(2 * vmem_need, 16 * 1024 * 1024)))

    kernel = partial(_fasternet_block_kernel, width=W, cp=cp, slice_pass=slice_pass)
    # NOTE(review #3): at large C, pl.Buffered(1) on the constant-index weight specs would
    # reclaim their unused second VMEM buffer; omitted here (weights are tiny at demo C).
    out = pl.pallas_call(
        kernel,
        out_shape=jax.ShapeDtypeStruct((M, C), jnp.float32),
        grid=(G,),
        in_specs=[
            pl.BlockSpec((None, P2, cp), lambda g: (g, 0, 0)),      # halo tiles (bf16)
            pl.BlockSpec((tpix, C), lambda g: (g, 0)),              # x (f32)
            pl.BlockSpec((9, cp, cp), lambda g: (0, 0, 0)),         # wc1
            pl.BlockSpec((cp, inner), lambda g: (0, 0)),            # w2a
            pl.BlockSpec((w2b_rows, inner), lambda g: (0, 0)),      # w2b
            pl.BlockSpec((1, inner), lambda g: (0, 0)),             # b2 (f32)
            pl.BlockSpec((inner, C), lambda g: (0, 0)),             # w3
        ],
        out_specs=pl.BlockSpec((tpix, C), lambda g: (g, 0)),
        compiler_params=pltpu.CompilerParams(
            dimension_semantics=("parallel",),
            vmem_limit_bytes=vmem_limit,
        ),
    )(halo, x_flat, wc1, w2a, w2b, b2, w3)
    return out.reshape(N, H, W, C)


def _reference(x, wpc_hwio, w2_mat, b2_vec, w3_mat, n_div=4, cast_dtype=None):
    """Pure-JAX reference.  cast_dtype=jnp.bfloat16 mimics the kernel's MXU operand
    rounding (f32 accumulation); cast_dtype=None is full-f32 module semantics."""
    N, H, W, C = x.shape
    cp = C // n_div
    c = (lambda a: a.astype(cast_dtype)) if cast_dtype is not None else (lambda a: a)
    hp = jax.lax.Precision.HIGHEST

    xpad = jnp.pad(x[..., :cp], ((0, 0), (1, 1), (1, 1), (0, 0)))
    y1 = jnp.zeros((N, H, W, cp), jnp.float32)
    for kh in range(3):
        for kw in range(3):
            y1 = y1 + jnp.einsum('nhwc,cd->nhwd', c(xpad[:, kh:kh + H, kw:kw + W, :]),
                                 c(wpc_hwio[kh, kw]), precision=hp,
                                 preferred_element_type=jnp.float32)
    y = jnp.concatenate([y1, x[..., cp:]], axis=-1)
    h = jnp.einsum('nhwc,cd->nhwd', c(y), c(w2_mat), precision=hp,
                   preferred_element_type=jnp.float32) + b2_vec
    h = 0.5 * h * (1.0 + jax.scipy.special.erf(h * _INV_SQRT2))
    z = jnp.einsum('nhwd,dc->nhwc', c(h), c(w3_mat), precision=hp,
                   preferred_element_type=jnp.float32)
    return x + z


if __name__ == "__main__":
    # small shapes consistent with FasterNetBlock(in_channels=16, n_div=4)
    N, H, W = 2, 16, 16
    C, n_div = 16, 4
    cp = C // n_div
    inner = 2 * C                      # inner_channels = in_channels * 2

    key = jax.random.PRNGKey(0)
    kx, k1, k2, k3, kg, kb, km, kv = jax.random.split(key, 8)

    x = jax.random.normal(kx, (N, H, W, C), dtype=jnp.float32)

    # PConv2d weight: PyTorch OIHW (cp, cp, 3, 3) -> HWIO (3, 3, cp, cp)
    wpc_oihw = jax.random.normal(k1, (cp, cp, 3, 3), jnp.float32) * (1.0 / math.sqrt(cp * 9))
    wpc_hwio = jnp.transpose(wpc_oihw, (2, 3, 1, 0))

    # conv2: 1x1 conv (inner, C) + BatchNorm (eval running stats), folded
    w2_oi = jax.random.normal(k2, (inner, C), jnp.float32) * (1.0 / math.sqrt(C))
    gamma = 1.0 + 0.1 * jax.random.normal(kg, (inner,), jnp.float32)
    beta = 0.1 * jax.random.normal(kb, (inner,), jnp.float32)
    running_mean = 0.1 * jax.random.normal(km, (inner,), jnp.float32)
    running_var = 1.0 + jax.nn.softplus(jax.random.normal(kv, (inner,), jnp.float32))
    eps = 1e-5
    scale = gamma / jnp.sqrt(running_var + eps)
    w2_mat = (w2_oi * scale[:, None]).T        # (C, inner), BN-folded
    b2_vec = beta - running_mean * scale       # (inner,)

    # conv3: 1x1 conv (C, inner), no bias -> matrix (inner, C)
    w3_oi = jax.random.normal(k3, (C, inner), jnp.float32) * (1.0 / math.sqrt(inner))
    w3_mat = w3_oi.T

    out = jax.block_until_ready(
        fasternet_block(x, wpc_hwio, w2_mat, b2_vec, w3_mat, n_div=n_div))
    assert out.shape == (N, H, W, C)

    # apples-to-apples: reference with the same bf16 MXU-operand rounding
    ref_b = jax.block_until_ready(
        _reference(x, wpc_hwio, w2_mat, b2_vec, w3_mat, n_div, jnp.bfloat16))
    err_b = float(jnp.max(jnp.abs(out - ref_b)))
    assert err_b < 4e-3, err_b

    # full-f32 module semantics (difference = bf16 MXU operand rounding only)
    ref_f = jax.block_until_ready(
        _reference(x, wpc_hwio, w2_mat, b2_vec, w3_mat, n_div, None))
    err_f = float(jnp.max(jnp.abs(out - ref_f)))
    assert err_f < 3e-2, err_f

    print("KERNEL_OK")
</pallas_src>

<mosaic_0001>
module attributes {stable_mosaic.version = 11 : i64} {
  func.func @_fasternet_block_kernel(%arg0: i32, %arg1: memref<1x112x4xbf16, #tpu.memory_space<vmem>>, %arg2: memref<64x16xf32, #tpu.memory_space<vmem>>, %arg3: memref<9x4x4xbf16, #tpu.memory_space<vmem>>, %arg4: memref<4x32xbf16, #tpu.memory_space<vmem>>, %arg5: memref<16x32xbf16, #tpu.memory_space<vmem>>, %arg6: memref<1x32xf32, #tpu.memory_space<vmem>>, %arg7: memref<32x16xbf16, #tpu.memory_space<vmem>>, %arg8: memref<64x16xf32, #tpu.memory_space<vmem>>) attributes {dimension_semantics = [#tpu.dimension_semantics<parallel>], iteration_bounds = array<i64: 8>, scalar_prefetch = 0 : i64, scratch_operands = 0 : i64, tpu.core_type = #tpu.core_type<tc>, window_params = [{transform_indices = @transform_0, window_bounds = array<i64: 1, 112, 4>}, {transform_indices = @transform_1, window_bounds = array<i64: 64, 16>}, {pipeline_mode = #tpu.pipeline_mode<synchronous>, transform_indices = @transform_2, window_bounds = array<i64: 9, 4, 4>}, {pipeline_mode = #tpu.pipeline_mode<synchronous>, transform_indices = @transform_3, window_bounds = array<i64: 4, 32>}, {pipeline_mode = #tpu.pipeline_mode<synchronous>, transform_indices = @transform_4, window_bounds = array<i64: 16, 32>}, {pipeline_mode = #tpu.pipeline_mode<synchronous>, transform_indices = @transform_5, window_bounds = array<i64: 1, 32>}, {pipeline_mode = #tpu.pipeline_mode<synchronous>, transform_indices = @transform_6, window_bounds = array<i64: 32, 16>}, {transform_indices = @transform_7, window_bounds = array<i64: 64, 16>}]} {
    %c0 = arith.constant 0 : index
    %c0_0 = arith.constant 0 : index
    %0 = vector.load %arg2[%c0, %c0_0] : memref<64x16xf32, #tpu.memory_space<vmem>>, vector<64x16xf32>
    %1 = arith.truncf %0 : vector<64x16xf32> to vector<64x16xbf16>
    %2 = tpu.iota {dimensions = array<i32: 0>} : vector<64x1xi32>
    %c16_i32 = arith.constant 16 : i32
    %c0_i32 = arith.constant 0 : i32
    %3 = arith.cmpi eq, %c16_i32, %c0_i32 : i32
    %c1_i32 = arith.constant 1 : i32
    %4 = arith.select %3, %c1_i32, %c16_i32 : i32
    %5 = vector.broadcast %4 : i32 to vector<64x1xi32>
    %6 = arith.remsi %2, %5 : vector<64x1xi32>
    %c0_i32_1 = arith.constant 0 : i32
    %7 = vector.broadcast %c0_i32_1 : i32 to vector<64x1xi32>
    %8 = arith.cmpi ne, %6, %7 : vector<64x1xi32>
    %c0_i32_2 = arith.constant 0 : i32
    %9 = vector.broadcast %c0_i32_2 : i32 to vector<64x1xi32>
    %10 = arith.cmpi slt, %6, %9 : vector<64x1xi32>
    %c0_i32_3 = arith.constant 0 : i32
    %11 = arith.cmpi slt, %4, %c0_i32_3 : i32
    %12 = vector.broadcast %11 : i1 to vector<64x1xi1>
    %13 = vector.broadcast %12 : vector<64x1xi1> to vector<64x1xi1>
    %14 = arith.xori %10, %13 : vector<64x1xi1>
    %15 = arith.andi %14, %8 : vector<64x1xi1>
    %16 = vector.broadcast %4 : i32 to vector<64x1xi32>
    %17 = arith.addi %6, %16 : vector<64x1xi32>
    %18 = arith.select %15, %17, %6 : vector<64x1xi1>, vector<64x1xi32>
    %cst = arith.constant 0.000000e+00 : f32
    %19 = vector.broadcast %cst : f32 to vector<64x4xf32>
    %cst_4 = arith.constant 0.000000e+00 : f32
    %20 = vector.broadcast %cst_4 : f32 to vector<64x4xf32>
    %c0_5 = arith.constant 0 : index
    %c7 = arith.constant 7 : index
    %c0_6 = arith.constant 0 : index
    %21 = vector.load %arg1[%c0_5, %c7, %c0_6] : memref<1x112x4xbf16, #tpu.memory_space<vmem>>, vector<1x64x4xbf16>
    %22 = vector.shape_cast %21 : vector<1x64x4xbf16> to vector<64x4xbf16>
    %c0_7 = arith.constant 0 : index
    %c0_8 = arith.constant 0 : index
    %c0_9 = arith.constant 0 : index
    %23 = vector.load %arg3[%c0_7, %c0_8, %c0_9] : memref<9x4x4xbf16, #tpu.memory_space<vmem>>, vector<1x4x4xbf16>
    %24 = vector.shape_cast %23 : vector<1x4x4xbf16> to vector<4x4xbf16>
    %cst_10 = arith.constant dense<0.000000e+00> : vector<64x4xf32>
    %25 = tpu.matmul %22, %24, %cst_10 {dimension_numbers = #tpu.dot_dimension_numbers<[1], [0], [0], [1], [0, 0, 1, 1], [], []>} : vector<64x4xbf16>, vector<4x4xbf16>, vector<64x4xf32> -> vector<64x4xf32>
    %26 = arith.addf %20, %25 : vector<64x4xf32>
    %c0_11 = arith.constant 0 : index
    %c23 = arith.constant 23 : index
    %c0_12 = arith.constant 0 : index
    %27 = vector.load %arg1[%c0_11, %c23, %c0_12] : memref<1x112x4xbf16, #tpu.memory_space<vmem>>, vector<1x64x4xbf16>
    %28 = vector.shape_cast %27 : vector<1x64x4xbf16> to vector<64x4xbf16>
    %c3 = arith.constant 3 : index
    %c0_13 = arith.constant 0 : index
    %c0_14 = arith.constant 0 : index
    %29 = vector.load %arg3[%c3, %c0_13, %c0_14] : memref<9x4x4xbf16, #tpu.memory_space<vmem>>, vector<1x4x4xbf16>
    %30 = vector.shape_cast %29 : vector<1x4x4xbf16> to vector<4x4xbf16>
    %cst_15 = arith.constant dense<0.000000e+00> : vector<64x4xf32>
    %31 = tpu.matmul %28, %30, %cst_15 {dimension_numbers = #tpu.dot_dimension_numbers<[1], [0], [0], [1], [0, 0, 1, 1], [], []>} : vector<64x4xbf16>, vector<4x4xbf16>, vector<64x4xf32> -> vector<64x4xf32>
    %32 = arith.addf %26, %31 : vector<64x4xf32>
    %c0_16 = arith.constant 0 : index
    %c39 = arith.constant 39 : index
    %c0_17 = arith.constant 0 : index
    %33 = vector.load %arg1[%c0_16, %c39, %c0_17] : memref<1x112x4xbf16, #tpu.memory_space<vmem>>, vector<1x64x4xbf16>
    %34 = vector.shape_cast %33 : vector<1x64x4xbf16> to vector<64x4xbf16>
    %c6 = arith.constant 6 : index
    %c0_18 = arith.constant 0 : index
    %c0_19 = arith.constant 0 : index
    %35 = vector.load %arg3[%c6, %c0_18, %c0_19] : memref<9x4x4xbf16, #tpu.memory_space<vmem>>, vector<1x4x4xbf16>
    %36 = vector.shape_cast %35 : vector<1x4x4xbf16> to vector<4x4xbf16>
    %cst_20 = arith.constant dense<0.000000e+00> : vector<64x4xf32>
    %37 = tpu.matmul %34, %36, %cst_20 {dimension_numbers = #tpu.dot_dimension_numbers<[1], [0], [0], [1], [0, 0, 1, 1], [], []>} : vector<64x4xbf16>, vector<4x4xbf16>, vector<64x4xf32> -> vector<64x4xf32>
    %38 = arith.addf %32, %37 : vector<64x4xf32>
    %c0_i32_21 = arith.constant 0 : i32
    %39 = vector.broadcast %c0_i32_21 : i32 to vector<64x1xi32>
    %40 = arith.cmpi eq, %18, %39 : vector<64x1xi32>
    %cst_22 = arith.constant 0.000000e+00 : f32
    %41 = vector.shape_cast %40 : vector<64x1xi1> to vector<64x1xi1>
    %42 = vector.broadcast %41 : vector<64x1xi1> to vector<64x4xi1>
    %43 = vector.broadcast %cst_22 : f32 to vector<64x4xf32>
    %44 = arith.select %42, %43, %38 : vector<64x4xi1>, vector<64x4xf32>
    %45 = arith.addf %19, %44 : vector<64x4xf32>
    %cst_23 = arith.constant 0.000000e+00 : f32
    %46 = vector.broadcast %cst_23 : f32 to vector<64x4xf32>
    %c0_24 = arith.constant 0 : index
    %c8 = arith.constant 8 : index
    %c0_25 = arith.constant 0 : index
    %47 = vector.load %arg1[%c0_24, %c8, %c0_25] : memref<1x112x4xbf16, #tpu.memory_space<vmem>>, vector<1x64x4xbf16>
    %48 = vector.shape_cast %47 : vector<1x64x4xbf16> to vector<64x4xbf16>
    %c1 = arith.constant 1 : index
    %c0_26 = arith.constant 0 : index
    %c0_27 = arith.constant 0 : index
    %49 = vector.load %arg3[%c1, %c0_26, %c0_27] : memref<9x4x4xbf16, #tpu.memory_space<vmem>>, vector<1x4x4xbf16>
    %50 = vector.shape_cast %49 : vector<1x4x4xbf16> to vector<4x4xbf16>
    %cst_28 = arith.constant dense<0.000000e+00> : vector<64x4xf32>
    %51 = tpu.matmul %48, %50, %cst_28 {dimension_numbers = #tpu.dot_dimension_numbers<[1], [0], [0], [1], [0, 0, 1, 1], [], []>} : vector<64x4xbf16>, vector<4x4xbf16>, vector<64x4xf32> -> vector<64x4xf32>
    %52 = arith.addf %46, %51 : vector<64x4xf32>
    %c0_29 = arith.constant 0 : index
    %c24 = arith.constant 24 : index
    %c0_30 = arith.constant 0 : index
    %53 = vector.load %arg1[%c0_29, %c24, %c0_30] : memref<1x112x4xbf16, #tpu.memory_space<vmem>>, vector<1x64x4xbf16>
    %54 = vector.shape_cast %53 : vector<1x64x4xbf16> to vector<64x4xbf16>
    %c4 = arith.constant 4 : index
    %c0_31 = arith.constant 0 : index
    %c0_32 = arith.constant 0 : index
    %55 = vector.load %arg3[%c4, %c0_31, %c0_32] : memref<9x4x4xbf16, #tpu.memory_space<vmem>>, vector<1x4x4xbf16>
    %56 = vector.shape_cast %55 : vector<1x4x4xbf16> to vector<4x4xbf16>
    %cst_33 = arith.constant dense<0.000000e+00> : vector<64x4xf32>
    %57 = tpu.matmul %54, %56, %cst_33 {dimension_numbers = #tpu.dot_dimension_numbers<[1], [0], [0], [1], [0, 0, 1, 1], [], []>} : vector<64x4xbf16>, vector<4x4xbf16>, vector<64x4xf32> -> vector<64x4xf32>
    %58 = arith.addf %52, %57 : vector<64x4xf32>
    %c0_34 = arith.constant 0 : index
    %c40 = arith.constant 40 : index
    %c0_35 = arith.constant 0 : index
    %59 = vector.load %arg1[%c0_34, %c40, %c0_35] : memref<1x112x4xbf16, #tpu.memory_space<vmem>>, vector<1x64x4xbf16>
    %60 = vector.shape_cast %59 : vector<1x64x4xbf16> to vector<64x4xbf16>
    %c7_36 = arith.constant 7 : index
    %c0_37 = arith.constant 0 : index
    %c0_38 = arith.constant 0 : index
    %61 = vector.load %arg3[%c7_36, %c0_37, %c0_38] : memref<9x4x4xbf16, #tpu.memory_space<vmem>>, vector<1x4x4xbf16>
    %62 = vector.shape_cast %61 : vector<1x4x4xbf16> to vector<4x4xbf16>
    %cst_39 = arith.constant dense<0.000000e+00> : vector<64x4xf32>
    %63 = tpu.matmul %60, %62, %cst_39 {dimension_numbers = #tpu.dot_dimension_numbers<[1], [0], [0], [1], [0, 0, 1, 1], [], []>} : vector<64x4xbf16>, vector<4x4xbf16>, vector<64x4xf32> -> vector<64x4xf32>
    %64 = arith.addf %58, %63 : vector<64x4xf32>
    %65 = arith.addf %45, %64 : vector<64x4xf32>
    %cst_40 = arith.constant 0.000000e+00 : f32
    %66 = vector.broadcast %cst_40 : f32 to vector<64x4xf32>
    %c0_41 = arith.constant 0 : index
    %c9 = arith.constant 9 : index
    %c0_42 = arith.constant 0 : index
    %67 = vector.load %arg1[%c0_41, %c9, %c0_42] : memref<1x112x4xbf16, #tpu.memory_space<vmem>>, vector<1x64x4xbf16>
    %68 = vector.shape_cast %67 : vector<1x64x4xbf16> to vector<64x4xbf16>
    %c2 = arith.constant 2 : index
    %c0_43 = arith.constant 0 : index
    %c0_44 = arith.constant 0 : index
    %69 = vector.load %arg3[%c2, %c0_43, %c0_44] : memref<9x4x4xbf16, #tpu.memory_space<vmem>>, vector<1x4x4xbf16>
    %70 = vector.shape_cast %69 : vector<1x4x4xbf16> to vector<4x4xbf16>
    %cst_45 = arith.constant dense<0.000000e+00> : vector<64x4xf32>
    %71 = tpu.matmul %68, %70, %cst_45 {dimension_numbers = #tpu.dot_dimension_numbers<[1], [0], [0], [1], [0, 0, 1, 1], [], []>} : vector<64x4xbf16>, vector<4x4xbf16>, vector<64x4xf32> -> vector<64x4xf32>
    %72 = arith.addf %66, %71 : vector<64x4xf32>
    %c0_46 = arith.constant 0 : index
    %c25 = arith.constant 25 : index
    %c0_47 = arith.constant 0 : index
    %73 = vector.load %arg1[%c0_46, %c25, %c0_47] : memref<1x112x4xbf16, #tpu.memory_space<vmem>>, vector<1x64x4xbf16>
    %74 = vector.shape_cast %73 : vector<1x64x4xbf16> to vector<64x4xbf16>
    %c5 = arith.constant 5 : index
    %c0_48 = arith.constant 0 : index
    %c0_49 = arith.constant 0 : index
    %75 = vector.load %arg3[%c5, %c0_48, %c0_49] : memref<9x4x4xbf16, #tpu.memory_space<vmem>>, vector<1x4x4xbf16>
    %76 = vector.shape_cast %75 : vector<1x4x4xbf16> to vector<4x4xbf16>
    %cst_50 = arith.constant dense<0.000000e+00> : vector<64x4xf32>
    %77 = tpu.matmul %74, %76, %cst_50 {dimension_numbers = #tpu.dot_dimension_numbers<[1], [0], [0], [1], [0, 0, 1, 1], [], []>} : vector<64x4xbf16>, vector<4x4xbf16>, vector<64x4xf32> -> vector<64x4xf32>
    %78 = arith.addf %72, %77 : vector<64x4xf32>
    %c0_51 = arith.constant 0 : index
    %c41 = arith.constant 41 : index
    %c0_52 = arith.constant 0 : index
    %79 = vector.load %arg1[%c0_51, %c41, %c0_52] : memref<1x112x4xbf16, #tpu.memory_space<vmem>>, vector<1x64x4xbf16>
    %80 = vector.shape_cast %79 : vector<1x64x4xbf16> to vector<64x4xbf16>
    %c8_53 = arith.constant 8 : index
    %c0_54 = arith.constant 0 : index
    %c0_55 = arith.constant 0 : index
    %81 = vector.load %arg3[%c8_53, %c0_54, %c0_55] : memref<9x4x4xbf16, #tpu.memory_space<vmem>>, vector<1x4x4xbf16>
    %82 = vector.shape_cast %81 : vector<1x4x4xbf16> to vector<4x4xbf16>
    %cst_56 = arith.constant dense<0.000000e+00> : vector<64x4xf32>
    %83 = tpu.matmul %80, %82, %cst_56 {dimension_numbers = #tpu.dot_dimension_numbers<[1], [0], [0], [1], [0, 0, 1, 1], [], []>} : vector<64x4xbf16>, vector<4x4xbf16>, vector<64x4xf32> -> vector<64x4xf32>
    %84 = arith.addf %78, %83 : vector<64x4xf32>
    %c15_i32 = arith.constant 15 : i32
    %85 = vector.broadcast %c15_i32 : i32 to vector<64x1xi32>
    %86 = arith.cmpi eq, %18, %85 : vector<64x1xi32>
    %cst_57 = arith.constant 0.000000e+00 : f32
    %87 = vector.shape_cast %86 : vector<64x1xi1> to vector<64x1xi1>
    %88 = vector.broadcast %87 : vector<64x1xi1> to vector<64x4xi1>
    %89 = vector.broadcast %cst_57 : f32 to vector<64x4xf32>
    %90 = arith.select %88, %89, %84 : vector<64x4xi1>, vector<64x4xf32>
    %91 = arith.addf %65, %90 : vector<64x4xf32>
    %92 = arith.truncf %91 : vector<64x4xf32> to vector<64x4xbf16>
    %c0_58 = arith.constant 0 : index
    %c0_59 = arith.constant 0 : index
    %93 = vector.load %arg4[%c0_58, %c0_59] : memref<4x32xbf16, #tpu.memory_space<vmem>>, vector<4x32xbf16>
    %cst_60 = arith.constant dense<0.000000e+00> : vector<64x32xf32>
    %94 = tpu.matmul %92, %93, %cst_60 {dimension_numbers = #tpu.dot_dimension_numbers<[1], [0], [0], [1], [0, 0, 1, 1], [], []>} : vector<64x4xbf16>, vector<4x32xbf16>, vector<64x32xf32> -> vector<64x32xf32>
    %c0_61 = arith.constant 0 : index
    %c0_62 = arith.constant 0 : index
    %95 = vector.load %arg5[%c0_61, %c0_62] : memref<16x32xbf16, #tpu.memory_space<vmem>>, vector<16x32xbf16>
    %cst_63 = arith.constant dense<0.000000e+00> : vector<64x32xf32>
    %96 = tpu.matmul %1, %95, %cst_63 {dimension_numbers = #tpu.dot_dimension_numbers<[1], [0], [0], [1], [0, 0, 1, 1], [], []>} : vector<64x16xbf16>, vector<16x32xbf16>, vector<64x32xf32> -> vector<64x32xf32>
    %97 = arith.addf %94, %96 : vector<64x32xf32>
    %c0_64 = arith.constant 0 : index
    %c0_65 = arith.constant 0 : index
    %98 = vector.load %arg6[%c0_64, %c0_65] : memref<1x32xf32, #tpu.memory_space<vmem>>, vector<1x32xf32>
    %99 = vector.broadcast %98 : vector<1x32xf32> to vector<64x32xf32>
    %100 = arith.addf %97, %99 : vector<64x32xf32>
    %cst_66 = arith.constant 0.707106769 : f32
    %101 = vector.broadcast %cst_66 : f32 to vector<64x32xf32>
    %102 = arith.mulf %100, %101 : vector<64x32xf32>
    %cst_67 = arith.constant 0.000000e+00 : f32
    %103 = vector.broadcast %cst_67 : f32 to vector<64x32xf32>
    %104 = arith.cmpf oge, %102, %103 : vector<64x32xf32>
    %cst_68 = arith.constant 1.000000e+00 : f32
    %cst_69 = arith.constant -1.000000e+00 : f32
    %105 = vector.broadcast %cst_68 : f32 to vector<64x32xf32>
    %106 = vector.broadcast %cst_69 : f32 to vector<64x32xf32>
    %107 = arith.select %104, %105, %106 : vector<64x32xi1>, vector<64x32xf32>
    %108 = math.absf %102 : vector<64x32xf32>
    %cst_70 = arith.constant 0.327591091 : f32
    %109 = vector.broadcast %cst_70 : f32 to vector<64x32xf32>
    %110 = arith.mulf %109, %108 : vector<64x32xf32>
    %cst_71 = arith.constant 1.000000e+00 : f32
    %111 = vector.broadcast %cst_71 : f32 to vector<64x32xf32>
    %112 = arith.addf %111, %110 : vector<64x32xf32>
    %113 = tpu.reciprocal %112 {approx = true} : vector<64x32xf32> -> vector<64x32xf32>
    %114 = arith.mulf %112, %113 : vector<64x32xf32>
    %cst_72 = arith.constant 2.000000e+00 : f32
    %115 = vector.broadcast %cst_72 : f32 to vector<64x32xf32>
    %116 = arith.subf %115, %114 : vector<64x32xf32>
    %117 = arith.mulf %113, %116 : vector<64x32xf32>
    %cst_73 = arith.constant 1.06140542 : f32
    %118 = vector.broadcast %cst_73 : f32 to vector<64x32xf32>
    %119 = arith.mulf %118, %117 : vector<64x32xf32>
    %cst_74 = arith.constant -1.45315206 : f32
    %120 = vector.broadcast %cst_74 : f32 to vector<64x32xf32>
    %121 = arith.addf %119, %120 : vector<64x32xf32>
    %122 = arith.mulf %121, %117 : vector<64x32xf32>
    %cst_75 = arith.constant 1.42141378 : f32
    %123 = vector.broadcast %cst_75 : f32 to vector<64x32xf32>
    %124 = arith.addf %122, %123 : vector<64x32xf32>
    %125 = arith.mulf %124, %117 : vector<64x32xf32>
    %cst_76 = arith.constant -0.284496725 : f32
    %126 = vector.broadcast %cst_76 : f32 to vector<64x32xf32>
    %127 = arith.addf %125, %126 : vector<64x32xf32>
    %128 = arith.mulf %127, %117 : vector<64x32xf32>
    %cst_77 = arith.constant 0.254829586 : f32
    %129 = vector.broadcast %cst_77 : f32 to vector<64x32xf32>
    %130 = arith.addf %128, %129 : vector<64x32xf32>
    %131 = arith.mulf %130, %117 : vector<64x32xf32>
    %cst_78 = arith.constant 0.000000e+00 : f32
    %132 = vector.broadcast %cst_78 : f32 to vector<64x32xf32>
    %133 = arith.subf %132, %108 : vector<64x32xf32>
    %134 = arith.mulf %133, %108 : vector<64x32xf32>
    %135 = math.exp %134 : vector<64x32xf32>
    %136 = arith.mulf %131, %135 : vector<64x32xf32>
    %cst_79 = arith.constant 1.000000e+00 : f32
    %137 = vector.broadcast %cst_79 : f32 to vector<64x32xf32>
    %138 = arith.subf %137, %136 : vector<64x32xf32>
    %139 = arith.mulf %107, %138 : vector<64x32xf32>
    %cst_80 = arith.constant 5.000000e-01 : f32
    %140 = vector.broadcast %cst_80 : f32 to vector<64x32xf32>
    %141 = arith.mulf %140, %100 : vector<64x32xf32>
    %cst_81 = arith.constant 1.000000e+00 : f32
    %142 = vector.broadcast %cst_81 : f32 to vector<64x32xf32>
    %143 = arith.addf %142, %139 : vector<64x32xf32>
    %144 = arith.mulf %141, %143 : vector<64x32xf32>
    %145 = arith.truncf %144 : vector<64x32xf32> to vector<64x32xbf16>
    %c0_82 = arith.constant 0 : index
    %c0_83 = arith.constant 0 : index
    %146 = vector.load %arg7[%c0_82, %c0_83] : memref<32x16xbf16, #tpu.memory_space<vmem>>, vector<32x16xbf16>
    %cst_84 = arith.constant dense<0.000000e+00> : vector<64x16xf32>
    %147 = tpu.matmul %145, %146, %cst_84 {dimension_numbers = #tpu.dot_dimension_numbers<[1], [0], [0], [1], [0, 0, 1, 1], [], []>} : vector<64x32xbf16>, vector<32x16xbf16>, vector<64x16xf32> -> vector<64x16xf32>
    %148 = arith.addf %0, %147 : vector<64x16xf32>
    %c0_85 = arith.constant 0 : index
    %c0_86 = arith.constant 0 : index
    %149 = vector.load %arg8[%c0_85, %c0_86] : memref<64x16xf32, #tpu.memory_space<vmem>>, vector<64x16xf32>
    tpu.vector_store %arg8[%c0_85, %c0_86], %148 {strides = array<i32>} : memref<64x16xf32, #tpu.memory_space<vmem>>, vector<64x16xf32>,
    return
  }
  func.func @transform_0(%arg0: i32) -> (i32, i32, i32) {
    %c0_i32 = arith.constant 0 : i32
    %c0_i32_0 = arith.constant 0 : i32
    %c0_i32_1 = arith.constant 0 : i32
    return %arg0, %c0_i32, %c0_i32_0 : i32, i32, i32
  }
  func.func @transform_1(%arg0: i32) -> (i32, i32) {
    %c0_i32 = arith.constant 0 : i32
    %c0_i32_0 = arith.constant 0 : i32
    return %arg0, %c0_i32 : i32, i32
  }
  func.func @transform_2(%arg0: i32) -> (i32, i32, i32) {
    %c0_i32 = arith.constant 0 : i32
    %c0_i32_0 = arith.constant 0 : i32
    %c0_i32_1 = arith.constant 0 : i32
    %c0_i32_2 = arith.constant 0 : i32
    return %c0_i32, %c0_i32_0, %c0_i32_1 : i32, i32, i32
  }
  func.func @transform_3(%arg0: i32) -> (i32, i32) {
    %c0_i32 = arith.constant 0 : i32
    %c0_i32_0 = arith.constant 0 : i32
    %c0_i32_1 = arith.constant 0 : i32
    return %c0_i32, %c0_i32_0 : i32, i32
  }
  func.func @transform_4(%arg0: i32) -> (i32, i32) {
    %c0_i32 = arith.constant 0 : i32
    %c0_i32_0 = arith.constant 0 : i32
    %c0_i32_1 = arith.constant 0 : i32
    return %c0_i32, %c0_i32_0 : i32, i32
  }
  func.func @transform_5(%arg0: i32) -> (i32, i32) {
    %c0_i32 = arith.constant 0 : i32
    %c0_i32_0 = arith.constant 0 : i32
    %c0_i32_1 = arith.constant 0 : i32
    return %c0_i32, %c0_i32_0 : i32, i32
  }
  func.func @transform_6(%arg0: i32) -> (i32, i32) {
    %c0_i32 = arith.constant 0 : i32
    %c0_i32_0 = arith.constant 0 : i32
    %c0_i32_1 = arith.constant 0 : i32
    return %c0_i32, %c0_i32_0 : i32, i32
  }
  func.func @transform_7(%arg0: i32) -> (i32, i32) {
    %c0_i32 = arith.constant 0 : i32
    %c0_i32_0 = arith.constant 0 : i32
    return %arg0, %c0_i32 : i32, i32
  }
}

</mosaic_0001>

<llo_original>
// kernel: fasternet_block.1
$region0: #{fasternet_block.1}
  #allocation0 [shape = 'u32[]', space=smem, size = 0x4, offset = 0x4, fixed_abs, tag = 'smem constant byte address 0x4 - core index']
  #allocation1 [shape = 'u32[144,128]{1,0:T(1,128)}', space=vmem, size = 0x12000, scoped, tag = 'internal scratch']
  %s0 = inlined_call_operand.vmem [shape: bf16[8,112,4], index: 0, kind: input, shape index: {}]
  %s1 = inlined_call_operand.vmem [shape: f32[512,16], index: 1, kind: input, shape index: {}]
  %s2 = inlined_call_operand.vmem [shape: bf16[9,4,4], index: 2, kind: input, shape index: {}]
  %s3 = inlined_call_operand.vmem [shape: bf16[4,32], index: 3, kind: input, shape index: {}]
  %s4 = inlined_call_operand.vmem [shape: bf16[16,32], index: 4, kind: input, shape index: {}]
  %s5 = inlined_call_operand.vmem [shape: f32[1,32], index: 5, kind: input, shape index: {}]
  %s6 = inlined_call_operand.vmem [shape: bf16[32,16], index: 6, kind: input, shape index: {}]
  %s7 = inlined_call_operand.hbm [shape: f32[512,16], index: 7, kind: output, shape index: {}]
  %s8 = sld [smem:[#allocation0]]
  $region61: #{fasternet_block.1} parent=0
    _
  %s10 = ssub.s32 1, %s8
  %s11 = scalar_select 0, %s10, %s8
  $region1: #{fasternet_block.1} parent=0
    #allocation2 [shape = 'u8[65536]{0}', space=vmem, size = 0x10000, scoped, tag = 'output window, operand 0']
    #allocation3 [shape = 's32[2]{0}', space=sflag, size = 0x8, scoped, tag = 'scoped memory for fasternet_block.1']
    %12 = vsyncpa [#allocation3], 0
    %s13 = scalar_lea.sflag [#allocation3], 1
    %14 = vsyncpa %s13, 0
    loop: start=0, step=1, limit=10
    $region2: #{fasternet_block.1} parent=1 // loop_pre_header
      _
    $region3: #{fasternet_block.1} parent=1 // loop_header
      %s16 = sphi 0, %s20
      %p17 = scmp.ge.s32.totalorder %s16, 10
      %s26 = sphi 0, %s28
      %s29 = sphi 0, %s26
      %s30 = sphi 0, %s29
      %s46 = sphi 0, %s30
      %s52 = sphi 0, %s54
      %s55 = sphi 0, %s52
      %s56 = sphi 0, %s55
      %s72 = sphi 0, %s56
      %s76 = sphi 0, %s76
      %s78 = sphi 0, %s76
      %s79 = sphi 0, %s78
      %s93 = sphi 0, %s79
      %s97 = sphi 0, %s97
      %s99 = sphi 0, %s97
      %s100 = sphi 0, %s99
      %s114 = sphi 0, %s100
      %s118 = sphi 0, %s118
      %s120 = sphi 0, %s118
      %s121 = sphi 0, %s120
      %s135 = sphi 0, %s121
      %s139 = sphi 0, %s139
      %s141 = sphi 0, %s139
      %s142 = sphi 0, %s141
      %s156 = sphi 0, %s142
      %s160 = sphi 0, %s160
      %s162 = sphi 0, %s160
      %s163 = sphi 0, %s162
      %s177 = sphi 0, %s163
      %s183 = sphi 0, %s185
      %s186 = sphi 0, %s183
      %s187 = sphi 0, %s186
      %s203 = sphi 0, %s187
    $region4: #{fasternet_block.1} parent=1 // loop_header_branch
      %19 = sbr.rel (%p17) target = $region8
    $region5: #{fasternet_block.1} parent=1 // loop_body
      %s21 = ssub.s32 %s16, 1
      %s22 = ssub.s32 %s16, 2
      %s23 = sadd.s32 %s16, 1
      %s24 = ssub.s32 %s16, %s23
      %p25 = scmp.eq.s32.totalorder %s24, 0
      %s27 = sadd.s32 %s26, 1
      %s28 = scalar_select %p25, %s26, %s27
      %p31 = pneg %p25
      %p32 = scmp.eq.s32.totalorder %s16, 7
      %p33 = por %p31, %p32
      %p34 = scmp.ne.s32.totalorder %s26, %s29
      %p35 = scmp.eq.s32.totalorder %s16, 0
      %p36 = por %p34, %p35
      %p37 = scmp.ne.s32.totalorder %s26, %s29
      %p38 = scmp.eq.s32.totalorder %s21, 7
      %p39 = por %p37, %p38
      %p40 = scmp.ne.s32.totalorder %s29, %s30
      %p41 = scmp.eq.s32.totalorder %s21, 0
      %p42 = por %p40, %p41
      %p43 = scmp.ne.s32.totalorder %s29, %s30
      %p44 = scmp.eq.s32.totalorder %s22, 7
      %p45 = por %p43, %p44
      %p47 = scmp.ne.s32.totalorder %s30, %s46
      %p48 = scmp.eq.s32.totalorder %s22, 0
      %p49 = por %p47, %p48
      %s50 = ssub.s32 %s16, %s23
      %p51 = scmp.eq.s32.totalorder %s50, 0
      %s53 = sadd.s32 %s52, 1
      %s54 = scalar_select %p51, %s52, %s53
      %p57 = pneg %p51
      %p58 = scmp.eq.s32.totalorder %s16, 7
      %p59 = por %p57, %p58
      %p60 = scmp.ne.s32.totalorder %s52, %s55
      %p61 = scmp.eq.s32.totalorder %s16, 0
      %p62 = por %p60, %p61
      %p63 = scmp.ne.s32.totalorder %s52, %s55
      %p64 = scmp.eq.s32.totalorder %s21, 7
      %p65 = por %p63, %p64
      %p66 = scmp.ne.s32.totalorder %s55, %s56
      %p67 = scmp.eq.s32.totalorder %s21, 0
      %p68 = por %p66, %p67
      %p69 = scmp.ne.s32.totalorder %s55, %s56
      %p70 = scmp.eq.s32.totalorder %s22, 7
      %p71 = por %p69, %p70
      %p73 = scmp.ne.s32.totalorder %s56, %s72
      %p74 = scmp.eq.s32.totalorder %s22, 0
      %p75 = por %p73, %p74
      %s77 = sadd.s32 %s76, 1
      %p80 = scmp.eq.s32.totalorder %s16, 7
      %p81 = scmp.ne.s32.totalorder %s76, %s78
      %p82 = scmp.eq.s32.totalorder %s16, 0
      %p83 = por %p81, %p82
      %p84 = scmp.ne.s32.totalorder %s76, %s78
      %p85 = scmp.eq.s32.totalorder %s21, 7
      %p86 = por %p84, %p85
      %p87 = scmp.ne.s32.totalorder %s78, %s79
      %p88 = scmp.eq.s32.totalorder %s21, 0
      %p89 = por %p87, %p88
      %p90 = scmp.ne.s32.totalorder %s78, %s79
      %p91 = scmp.eq.s32.totalorder %s22, 7
      %p92 = por %p90, %p91
      %p94 = scmp.ne.s32.totalorder %s79, %s93
      %p95 = scmp.eq.s32.totalorder %s22, 0
      %p96 = por %p94, %p95
      %s98 = sadd.s32 %s97, 1
      %p101 = scmp.eq.s32.totalorder %s16, 7
      %p102 = scmp.ne.s32.totalorder %s97, %s99
      %p103 = scmp.eq.s32.totalorder %s16, 0
      %p104 = por %p102, %p103
      %p105 = scmp.ne.s32.totalorder %s97, %s99
      %p106 = scmp.eq.s32.totalorder %s21, 7
      %p107 = por %p105, %p106
      %p108 = scmp.ne.s32.totalorder %s99, %s100
      %p109 = scmp.eq.s32.totalorder %s21, 0
      %p110 = por %p108, %p109
      %p111 = scmp.ne.s32.totalorder %s99, %s100
      %p112 = scmp.eq.s32.totalorder %s22, 7
      %p113 = por %p111, %p112
      %p115 = scmp.ne.s32.totalorder %s100, %s114
      %p116 = scmp.eq.s32.totalorder %s22, 0
      %p117 = por %p115, %p116
      %s119 = sadd.s32 %s118, 1
      %p122 = scmp.eq.s32.totalorder %s16, 7
      %p123 = scmp.ne.s32.totalorder %s118, %s120
      %p124 = scmp.eq.s32.totalorder %s16, 0
      %p125 = por %p123, %p124
      %p126 = scmp.ne.s32.totalorder %s118, %s120
      %p127 = scmp.eq.s32.totalorder %s21, 7
      %p128 = por %p126, %p127
      %p129 = scmp.ne.s32.totalorder %s120, %s121
      %p130 = scmp.eq.s32.totalorder %s21, 0
      %p131 = por %p129, %p130
      %p132 = scmp.ne.s32.totalorder %s120, %s121
      %p133 = scmp.eq.s32.totalorder %s22, 7
      %p134 = por %p132, %p133
      %p136 = scmp.ne.s32.totalorder %s121, %s135
      %p137 = scmp.eq.s32.totalorder %s22, 0
      %p138 = por %p136, %p137
      %s140 = sadd.s32 %s139, 1
      %p143 = scmp.eq.s32.totalorder %s16, 7
      %p144 = scmp.ne.s32.totalorder %s139, %s141
      %p145 = scmp.eq.s32.totalorder %s16, 0
      %p146 = por %p144, %p145
      %p147 = scmp.ne.s32.totalorder %s139, %s141
      %p148 = scmp.eq.s32.totalorder %s21, 7
      %p149 = por %p147, %p148
      %p150 = scmp.ne.s32.totalorder %s141, %s142
      %p151 = scmp.eq.s32.totalorder %s21, 0
      %p152 = por %p150, %p151
      %p153 = scmp.ne.s32.totalorder %s141, %s142
      %p154 = scmp.eq.s32.totalorder %s22, 7
      %p155 = por %p153, %p154
      %p157 = scmp.ne.s32.totalorder %s142, %s156
      %p158 = scmp.eq.s32.totalorder %s22, 0
      %p159 = por %p157, %p158
      %s161 = sadd.s32 %s160, 1
      %p164 = scmp.eq.s32.totalorder %s16, 7
      %p165 = scmp.ne.s32.totalorder %s160, %s162
      %p166 = scmp.eq.s32.totalorder %s16, 0
      %p167 = por %p165, %p166
      %p168 = scmp.ne.s32.totalorder %s160, %s162
      %p169 = scmp.eq.s32.totalorder %s21, 7
      %p170 = por %p168, %p169
      %p171 = scmp.ne.s32.totalorder %s162, %s163
      %p172 = scmp.eq.s32.totalorder %s21, 0
      %p173 = por %p171, %p172
      %p174 = scmp.ne.s32.totalorder %s162, %s163
      %p175 = scmp.eq.s32.totalorder %s22, 7
      %p176 = por %p174, %p175
      %p178 = scmp.ne.s32.totalorder %s163, %s177
      %p179 = scmp.eq.s32.totalorder %s22, 0
      %p180 = por %p178, %p179
      %s181 = ssub.s32 %s16, %s23
      %p182 = scmp.eq.s32.totalorder %s181, 0
      %s184 = sadd.s32 %s183, 1
      %s185 = scalar_select %p182, %s183, %s184
      %p188 = pneg %p182
      %p189 = scmp.eq.s32.totalorder %s16, 7
      %p190 = por %p188, %p189
      %p191 = scmp.ne.s32.totalorder %s183, %s186
      %p192 = scmp.eq.s32.totalorder %s16, 0
      %p193 = por %p191, %p192
      %p194 = scmp.ne.s32.totalorder %s183, %s186
      %p195 = scmp.eq.s32.totalorder %s21, 7
      %p196 = por %p194, %p195
      %p197 = scmp.ne.s32.totalorder %s186, %s187
      %p198 = scmp.eq.s32.totalorder %s21, 0
      %p199 = por %p197, %p198
      %p200 = scmp.ne.s32.totalorder %s186, %s187
      %p201 = scmp.eq.s32.totalorder %s22, 7
      %p202 = por %p200, %p201
      %p204 = scmp.ne.s32.totalorder %s187, %s203
      %p205 = scmp.eq.s32.totalorder %s22, 0
      %p206 = por %p204, %p205
      %p207 = scmp.le.s32.totalorder 1, %s16
      %p208 = scmp.lt.s32.totalorder %s16, 9
      %p209 = pnand %p207, %p208
      %p210 = pneg %p209
      // Predicated region
      $region9: #{fasternet_block.1} parent=5 // pred_check
        _
      $region10: #{fasternet_block.1} parent=5 // pred_check_branch
        %212 = sbr.rel (%p209) target = $region12
      $region11: #{fasternet_block.1} parent=5 // pred_region
        %s213 = ssub.s32 %s16, 1
        // Predicated region
        $region13: #{fasternet_block.1} parent=11 // pred_check
          %p214 = pneg %p89
        $region14: #{fasternet_block.1} parent=11 // pred_check_branch
          %216 = sbr.rel (%p214) target = $region16
        $region15: #{fasternet_block.1} parent=11 // pred_region
          _
        $region16: #{fasternet_block.1} parent=11 // pred_fallthru
          _
        // Predicated region
        $region17: #{fasternet_block.1} parent=11 // pred_check
          %p217 = pneg %p110
        $region18: #{fasternet_block.1} parent=11 // pred_check_branch
          %219 = sbr.rel (%p217) target = $region20
        $region19: #{fasternet_block.1} parent=11 // pred_region
          _
        $region20: #{fasternet_block.1} parent=11 // pred_fallthru
          _
        // Predicated region
        $region21: #{fasternet_block.1} parent=11 // pred_check
          %p220 = pneg %p131
        $region22: #{fasternet_block.1} parent=11 // pred_check_branch
          %222 = sbr.rel (%p220) target = $region24
        $region23: #{fasternet_block.1} parent=11 // pred_region
          _
        $region24: #{fasternet_block.1} parent=11 // pred_fallthru
          _
        // Predicated region
        $region25: #{fasternet_block.1} parent=11 // pred_check
          %p223 = pneg %p152
        $region26: #{fasternet_block.1} parent=11 // pred_check_branch
          %225 = sbr.rel (%p223) target = $region28
        $region27: #{fasternet_block.1} parent=11 // pred_region
          _
        $region28: #{fasternet_block.1} parent=11 // pred_fallthru
          _
        // Predicated region
        $region29: #{fasternet_block.1} parent=11 // pred_check
          %p226 = pneg %p173
        $region30: #{fasternet_block.1} parent=11 // pred_check_branch
          %228 = sbr.rel (%p226) target = $region32
        $region31: #{fasternet_block.1} parent=11 // pred_region
          _
        $region32: #{fasternet_block.1} parent=11 // pred_fallthru
          _
      $region12: #{fasternet_block.1} parent=5 // pred_fallthru
        _
      %p229 = scmp.lt.s32.totalorder %s16, 8
      // Predicated region
      $region33: #{fasternet_block.1} parent=5 // pred_check
        %p230 = pneg %p229
      $region34: #{fasternet_block.1} parent=5 // pred_check_branch
        %232 = sbr.rel (%p230) target = $region36
      $region35: #{fasternet_block.1} parent=5 // pred_region
        // Predicated region
        $region37: #{fasternet_block.1} parent=35 // pred_check
          %p233 = pneg %p36
        $region38: #{fasternet_block.1} parent=35 // pred_check_branch
          %235 = sbr.rel (%p233) target = $region40
        $region39: #{fasternet_block.1} parent=35 // pred_region
          %p236 = scmp.lt.s32.totalorder %s16, 7
          %s237 = scalar_select %p236, %s16, 7
          %s238 = smul.addr %s237, 14
          %s239 = smul.addr %s238, 4
          %s240 = scalar_lea.vmem %s0, %s239
        $region40: #{fasternet_block.1} parent=35 // pred_fallthru
          _
        // Predicated region
        $region41: #{fasternet_block.1} parent=35 // pred_check
          %p241 = pneg %p62
        $region42: #{fasternet_block.1} parent=35 // pred_check_branch
          %243 = sbr.rel (%p241) target = $region44
        $region43: #{fasternet_block.1} parent=35 // pred_region
          %s244 = smul.u32 8, %s16
          %p245 = scmp.lt.s32.totalorder %s244, 63
          %s246 = scalar_select %p245, %s244, 63
          %s247 = smul.addr %s246, 8
          %s248 = scalar_lea.vmem %s1, %s247
          %s249 = smul.u32 8, %s16
        $region44: #{fasternet_block.1} parent=35 // pred_fallthru
          _
      $region36: #{fasternet_block.1} parent=5 // pred_fallthru
        _
      %p250 = scmp.le.s32.totalorder 1, %s16
      %p251 = scmp.lt.s32.totalorder %s16, 9
      %p252 = pnand %p250, %p251
      %p253 = pneg %p252
      // Predicated region
      $region45: #{fasternet_block.1} parent=5 // pred_check
        _
      $region46: #{fasternet_block.1} parent=5 // pred_check_branch
        %255 = sbr.rel (%p252) target = $region48
      $region47: #{fasternet_block.1} parent=5 // pred_region
        %s256 = ssub.s32 %s16, 1
        %p257 = scmp.lt.s32.totalorder %s21, 7
        %s258 = scalar_select %p257, %s21, 7
        %s259 = smul.addr %s258, 14
        %s260 = smul.addr %s259, 4
        %s261 = scalar_lea.vmem %s0, %s260
        %p262 = pneg %p42
        %p263 = pneg %p39
        %s264 = smul.u32 8, %s21
        %p265 = scmp.lt.s32.totalorder %s264, 63
        %s266 = scalar_select %p265, %s264, 63
        %s267 = smul.addr %s266, 8
        %s268 = scalar_lea.vmem %s1, %s267
        %p269 = pneg %p68
        %p270 = pneg %p65
        %p271 = pneg %p89
        %p272 = pneg %p86
        %p273 = pneg %p110
        %p274 = pneg %p107
        %p275 = pneg %p131
        %p276 = pneg %p128
        %p277 = pneg %p152
        %p278 = pneg %p149
        %p279 = pneg %p173
        %p280 = pneg %p170
        %p281 = pneg %p199
        %p282 = pneg %p196
        %s283 = sand.u32 %s186, 1
        %s284 = scalar_lea.sflag [#allocation3], %s283
        %s285 = sand.u32 %s186, 1
        %s286 = smul.addr %s285, 64
        %s287 = scalar_lea.vmem [#allocation2], %s286
        %p288 = scmp.lt.s32.totalorder %s21, 7
        %s289 = scalar_select %p288, %s21, 7
        %s290 = smul.addr %s289, 14
        %s291 = smul.addr %s290, 4
        %s292 = scalar_lea.vmem %s0, %s291
        %s293 = smul.u32 8, %s21
        %p294 = scmp.lt.s32.totalorder %s293, 63
        %s295 = scalar_select %p294, %s293, 63
        %s296 = smul.addr %s295, 8
        %s297 = scalar_lea.vmem %s1, %s296
        %s298 = smul.u32 8, %s21
        %s299 = smul.u32 8, %s21
        %v301 = vld [vmem:[%s297] sm:$0xff]
        %v302 = vld [vmem:[%s297 + $0x8] sm:$0xff]
        %v303 = vld [vmem:[%s297 + $0x10] sm:$0xff]
        %v304 = vld [vmem:[%s297 + $0x18] sm:$0xff]
        %v305 = vld [vmem:[%s297 + $0x20] sm:$0xff]
        %v306 = vld [vmem:[%s297 + $0x28] sm:$0xff]
        %v307 = vld [vmem:[%s297 + $0x30] sm:$0xff]
        %v308 = vld [vmem:[%s297 + $0x38] sm:$0xff]
        %v309 = vpack.c.bf16 %v302, %v301
        %v310 = vpack.c.bf16 %v304, %v303
        %v311 = vpack.c.bf16 %v306, %v305
        %v312 = vpack.c.bf16 %v308, %v307
        %v313 = vlaneseq
        %v314 = vshrl.u32 %v313, 7
        %v315 = vadd.s32 %v314, 8
        %v316 = vadd.s32 %v314, 16
        %v317 = vadd.s32 %v314, 24
        %v318 = vadd.s32 %v314, 32
        %v319 = vadd.s32 %v314, 40
        %v320 = vadd.s32 %v314, 48
        %v321 = vadd.s32 %v314, 56
        %vm322 = vcmp.lt.s32.totalorder %v314, 0
        %v323 = vsub.s32 0, %v314
        %v324 = vsel %vm322, %v323, %v314
        %v325 = vshrl.u32 %v324, 4
        %v326 = vand.u32 %v324, 15
        %v327 = vsub.s32 0, %v326
        %v328 = vsel %vm322, %v327, %v326
        %vm329 = vcmp.lt.s32.totalorder %v315, 0
        %v330 = vsub.s32 0, %v315
        %v331 = vsel %vm329, %v330, %v315
        %v332 = vshrl.u32 %v331, 4
        %v333 = vand.u32 %v331, 15
        %v334 = vsub.s32 0, %v333
        %v335 = vsel %vm329, %v334, %v333
        %vm336 = vcmp.lt.s32.totalorder %v316, 0
        %v337 = vsub.s32 0, %v316
        %v338 = vsel %vm336, %v337, %v316
        %v339 = vshrl.u32 %v338, 4
        %v340 = vand.u32 %v338, 15
        %v341 = vsub.s32 0, %v340
        %v342 = vsel %vm336, %v341, %v340
        %vm343 = vcmp.lt.s32.totalorder %v317, 0
        %v344 = vsub.s32 0, %v317
        %v345 = vsel %vm343, %v344, %v317
        %v346 = vshrl.u32 %v345, 4
        %v347 = vand.u32 %v345, 15
        %v348 = vsub.s32 0, %v347
        %v349 = vsel %vm343, %v348, %v347
        %vm350 = vcmp.lt.s32.totalorder %v318, 0
        %v351 = vsub.s32 0, %v318
        %v352 = vsel %vm350, %v351, %v318
        %v353 = vshrl.u32 %v352, 4
        %v354 = vand.u32 %v352, 15
        %v355 = vsub.s32 0, %v354
        %v356 = vsel %vm350, %v355, %v354
        %vm357 = vcmp.lt.s32.totalorder %v319, 0
        %v358 = vsub.s32 0, %v319
        %v359 = vsel %vm357, %v358, %v319
        %v360 = vshrl.u32 %v359, 4
        %v361 = vand.u32 %v359, 15
        %v362 = vsub.s32 0, %v361
        %v363 = vsel %vm357, %v362, %v361
        %vm364 = vcmp.lt.s32.totalorder %v320, 0
        %v365 = vsub.s32 0, %v320
        %v366 = vsel %vm364, %v365, %v320
        %v367 = vshrl.u32 %v366, 4
        %v368 = vand.u32 %v366, 15
        %v369 = vsub.s32 0, %v368
        %v370 = vsel %vm364, %v369, %v368
        %vm371 = vcmp.lt.s32.totalorder %v321, 0
        %v372 = vsub.s32 0, %v321
        %v373 = vsel %vm371, %v372, %v321
        %v374 = vshrl.u32 %v373, 4
        %v375 = vand.u32 %v373, 15
        %v376 = vsub.s32 0, %v375
        %v377 = vsel %vm371, %v376, %v375
        %vm378 = vcmp.ne.s32.totalorder %v328, 0
        %vm379 = vcmp.ne.s32.totalorder %v335, 0
        %vm380 = vcmp.ne.s32.totalorder %v342, 0
        %vm381 = vcmp.ne.s32.totalorder %v349, 0
        %vm382 = vcmp.ne.s32.totalorder %v356, 0
        %vm383 = vcmp.ne.s32.totalorder %v363, 0
        %vm384 = vcmp.ne.s32.totalorder %v370, 0
        %vm385 = vcmp.ne.s32.totalorder %v377, 0
        %vm386 = vcmp.lt.s32.totalorder %v328, 0
        %vm387 = vcmp.lt.s32.totalorder %v335, 0
        %vm388 = vcmp.lt.s32.totalorder %v342, 0
        %vm389 = vcmp.lt.s32.totalorder %v349, 0
        %vm390 = vcmp.lt.s32.totalorder %v356, 0
        %vm391 = vcmp.lt.s32.totalorder %v363, 0
        %vm392 = vcmp.lt.s32.totalorder %v370, 0
        %vm393 = vcmp.lt.s32.totalorder %v377, 0
        %vm394 = vmand %vm386, %vm378
        %vm395 = vmand %vm387, %vm379
        %vm396 = vmand %vm388, %vm380
        %vm397 = vmand %vm389, %vm381
        %vm398 = vmand %vm390, %vm382
        %vm399 = vmand %vm391, %vm383
        %vm400 = vmand %vm392, %vm384
        %vm401 = vmand %vm393, %vm385
        %v402 = vadd.s32 %v328, 16
        %v403 = vadd.s32 %v335, 16
        %v404 = vadd.s32 %v342, 16
        %v405 = vadd.s32 %v349, 16
        %v406 = vadd.s32 %v356, 16
        %v407 = vadd.s32 %v363, 16
        %v408 = vadd.s32 %v370, 16
        %v409 = vadd.s32 %v377, 16
        %v410 = vsel %vm394, %v402, %v328
        %v411 = vsel %vm395, %v403, %v335
        %v412 = vsel %vm396, %v404, %v342
        %v413 = vsel %vm397, %v405, %v349
        %v414 = vsel %vm398, %v406, %v356
        %v415 = vsel %vm399, %v407, %v363
        %v416 = vsel %vm400, %v408, %v370
        %v417 = vsel %vm401, %v409, %v377
        %v418 = vld [vmem:[%s292] sm:$0x8]
        %v419 = vld [vmem:[%s292 + $0x4] sm:$0xf]
        %v420 = vld [vmem:[%s292 + $0x8] sm:$0xf]
        %v421 = vld [vmem:[%s292 + $0xc] sm:$0xf]
        %v422 = vld [vmem:[%s292 + $0x10] sm:$0xf]
        %v423 = vld [vmem:[%s292 + $0x14] sm:$0xf]
        %v424 = vld [vmem:[%s292 + $0x18] sm:$0xf]
        %v425 = vld [vmem:[%s292 + $0x1c] sm:$0xf]
        %v426 = vld [vmem:[%s292 + $0x20] sm:$0xf]
        %v427 = vld [vmem:[%s2] sm:$0x3]
        %v428 = vld [vmem:[%s292 + $0x8] sm:$0x8]
        %v429 = vld [vmem:[%s292 + $0x24] sm:$0xf]
        %v430 = vld [vmem:[%s292 + $0x28] sm:$0xf]
        %s431 = scalar_lea.vmem %s2, 6
        %v432 = vld [vmem:[%s431] sm:$0x3]
        %v442 = vunpack.c.l.b16 %v428
        %v443 = vunpack.c.l.b16 %v421
        %v444 = vunpack.c.l.b16 %v422
        %v445 = vunpack.c.l.b16 %v423
        %v446 = vunpack.c.l.b16 %v424
        %v447 = vunpack.c.l.b16 %v425
        %v448 = vunpack.c.l.b16 %v426
        %v449 = vunpack.c.l.b16 %v429
        %v450 = vunpack.c.l.b16 %v430
        %v451 = vpack.c.b16 %v443, %v442
        %v452 = vpack.c.b16 %v445, %v444
        %v453 = vpack.c.b16 %v447, %v446
        %v454 = vpack.c.b16 %v449, %v448
        %v455 = vpack.c.b16 %v450, %v450
        %vm456 = vsmask.f32 4352
        %v458 = vshrl.u32 %v451, 16
        %v460 = vrot.slane %v458, 3
        %v461 = vshll.u32 %v451, 16
        %v463 = vrot.slane %v461, 4
        %v464 = vor.u32 %v460, %v463
        %v466 = vshrl.u32 %v452, 16
        %v468 = vrot.slane %v466, 3
        %v469 = vshll.u32 %v452, 16
        %v471 = vrot.slane %v469, 4
        %v472 = vor.u32 %v468, %v471
        %v473 = vsel %vm456, %v464, %v472
        %v475 = vshrl.u32 %v453, 16
        %v477 = vrot.slane %v475, 3
        %v478 = vshll.u32 %v453, 16
        %v480 = vrot.slane %v478, 4
        %v481 = vor.u32 %v477, %v480
        %v482 = vsel %vm456, %v472, %v481
        %v484 = vshrl.u32 %v454, 16
        %v486 = vrot.slane %v484, 3
        %v487 = vshll.u32 %v454, 16
        %v489 = vrot.slane %v487, 4
        %v490 = vor.u32 %v486, %v489
        %v491 = vsel %vm456, %v481, %v490
        %v493 = vshrl.u32 %v455, 16
        %v495 = vrot.slane %v493, 3
        %v496 = vshll.u32 %v455, 16
        %v498 = vrot.slane %v496, 4
        %v499 = vor.u32 %v495, %v498
        %v500 = vsel %vm456, %v490, %v499
        %vm501 = vcmask 31744
        %v503 = vsel %vm501, %v473, 0
        %v506 = vsel %vm501, %v482, 0
        %v509 = vsel %vm501, %v491, 0
        %v512 = vsel %vm501, %v500, 0
        %vm514 = vcmask 1041408
        %v516 = vsel %vm514, %v432, 0
        %518 = vmatprep.subr.bf16.mxu0 0
        %519 = vmatpush1.bf16.msra.mxu0 0
        %520 = vmatprep.subr.bf16.mxu0 0
        %521 = vmatpush1.bf16.msra.mxu0 0
        %522 = vmatprep.subr.bf16.mxu0 0
        %523 = vmatpush1.bf16.msra.mxu0 0
        %524 = vmatprep.subr.bf16.mxu0 0
        %525 = vmatpush1.bf16.msra.mxu0 0
        %526 = vmatprep.subr.bf16.mxu0 0
        %527 = vmatpush1.bf16.msra.mxu0 0
        %528 = vmatprep.subr.bf16.mxu0 0
        %529 = vmatpush1.bf16.msra.mxu0 0
        %530 = vmatprep.subr.bf16.mxu0 0
        %531 = vmatpush1.bf16.msra.mxu0 0
        %532 = vmatprep.subr.bf16.mxu0 0
        %533 = vmatpush1.bf16.msra.mxu0 %v516
        %534 = vmatprep.subr.bf16.mxu0 0
        %535 = vmatpush2.bf16.msra.mxu0 0
        %536 = vmatprep.subr.bf16.mxu0 0
        %537 = vmatpush2.bf16.msra.mxu0 0
        %538 = vmatprep.subr.bf16.mxu0 0
        %539 = vmatpush2.bf16.msra.mxu0 0
        %540 = vmatprep.subr.bf16.mxu0 0
        %541 = vmatpush2.bf16.msra.mxu0 0
        %542 = vmatprep.subr.bf16.mxu0 0
        %543 = vmatpush2.bf16.msra.mxu0 0
        %544 = vmatprep.subr.bf16.mxu0 0
        %545 = vmatpush2.bf16.msra.mxu0 0
        %546 = vmatprep.subr.bf16.mxu0 0
        %547 = vmatpush2.bf16.msra.mxu0 0
        %548 = vmatprep.subr.bf16.mxu0 0
        %549 = vmatpush2.bf16.msra.mxu0 0
        %550 = vmatprep.mubr.bf16.mxu0 0
        %551 = vmatmul.mubr.bf16.gmra.mxu0 %v503
        %v552 = vpop.f32.mrf.mxu0
        %v553 = vadd.f32 0.0, %v552
        %v554 = vpop.f32.mrf.mxu0
        %v555 = vpop.f32.mrf.mxu0
        %v556 = vadd.f32 0.0, %v555
        %v557 = vpop.f32.mrf.mxu0
        %558 = vmatprep.mubr.bf16.mxu0 0
        %559 = vmatmul.mubr.bf16.gmra.mxu0 %v506
        %v560 = vpop.f32.mrf.mxu0
        %v561 = vadd.f32 0.0, %v560
        %v562 = vpop.f32.mrf.mxu0
        %v563 = vpop.f32.mrf.mxu0
        %v564 = vadd.f32 0.0, %v563
        %v565 = vpop.f32.mrf.mxu0
        %566 = vmatprep.mubr.bf16.mxu0 0
        %567 = vmatmul.mubr.bf16.gmra.mxu0 %v509
        %v568 = vpop.f32.mrf.mxu0
        %v569 = vadd.f32 0.0, %v568
        %v570 = vpop.f32.mrf.mxu0
        %v571 = vpop.f32.mrf.mxu0
        %v572 = vadd.f32 0.0, %v571
        %v573 = vpop.f32.mrf.mxu0
        %574 = vmatprep.mubr.bf16.mxu0 0
        %575 = vmatmul.mubr.bf16.gmra.mxu0 %v512
        %v576 = vpop.f32.mrf.mxu0
        %v577 = vadd.f32 0.0, %v576
        %v578 = vpop.f32.mrf.mxu0
        %v579 = vpop.f32.mrf.mxu0
        %v580 = vadd.f32 0.0, %v579
        %v581 = vpop.f32.mrf.mxu0
        %582 = vdwg.mxu0
        %v586 = vunpack.c.l.b16 %v418
        %v587 = vunpack.c.l.b16 %v419
        %v588 = vunpack.c.l.b16 %v420
        %v589 = vpack.c.b16 %v587, %v586
        %v590 = vpack.c.b16 %v443, %v588
        %v591 = vpack.c.b16 %v448, %v448
        %v593 = vshrl.u32 %v589, 16
        %v595 = vrot.slane %v593, 3
        %v596 = vshll.u32 %v589, 16
        %v598 = vrot.slane %v596, 4
        %v599 = vor.u32 %v595, %v598
        %v601 = vshrl.u32 %v590, 16
        %v603 = vrot.slane %v601, 3
        %v604 = vshll.u32 %v590, 16
        %v606 = vrot.slane %v604, 4
        %v607 = vor.u32 %v603, %v606
        %v608 = vsel %vm456, %v599, %v607
        %v609 = vsel %vm456, %v607, %v472
        %v611 = vshrl.u32 %v591, 16
        %v613 = vrot.slane %v611, 3
        %v614 = vshll.u32 %v591, 16
        %v616 = vrot.slane %v614, 4
        %v617 = vor.u32 %v613, %v616
        %v618 = vsel %vm456, %v481, %v617
        %v620 = vsel %vm501, %v608, 0
        %v623 = vsel %vm501, %v609, 0
        %v626 = vsel %vm501, %v618, 0
        %v629 = vsel %vm514, %v427, 0
        %631 = vmatprep.subr.bf16.mxu0 0
        %632 = vmatpush1.bf16.msra.mxu0 0
        %633 = vmatprep.subr.bf16.mxu0 0
        %634 = vmatpush1.bf16.msra.mxu0 0
        %635 = vmatprep.subr.bf16.mxu0 0
        %636 = vmatpush1.bf16.msra.mxu0 0
        %637 = vmatprep.subr.bf16.mxu0 0
        %638 = vmatpush1.bf16.msra.mxu0 0
        %639 = vmatprep.subr.bf16.mxu0 0
        %640 = vmatpush1.bf16.msra.mxu0 0
        %641 = vmatprep.subr.bf16.mxu0 0
        %642 = vmatpush1.bf16.msra.mxu0 0
        %643 = vmatprep.subr.bf16.mxu0 0
        %644 = vmatpush1.bf16.msra.mxu0 0
        %645 = vmatprep.subr.bf16.mxu0 0
        %646 = vmatpush1.bf16.msra.mxu0 %v629
        %647 = vmatprep.subr.bf16.mxu0 0
        %648 = vmatpush2.bf16.msra.mxu0 0
        %649 = vmatprep.subr.bf16.mxu0 0
        %650 = vmatpush2.bf16.msra.mxu0 0
        %651 = vmatprep.subr.bf16.mxu0 0
        %652 = vmatpush2.bf16.msra.mxu0 0
        %653 = vmatprep.subr.bf16.mxu0 0
        %654 = vmatpush2.bf16.msra.mxu0 0
        %655 = vmatprep.subr.bf16.mxu0 0
        %656 = vmatpush2.bf16.msra.mxu0 0
        %657 = vmatprep.subr.bf16.mxu0 0
        %658 = vmatpush2.bf16.msra.mxu0 0
        %659 = vmatprep.subr.bf16.mxu0 0
        %660 = vmatpush2.bf16.msra.mxu0 0
        %661 = vmatprep.subr.bf16.mxu0 0
        %662 = vmatpush2.bf16.msra.mxu0 0
        %663 = vmatprep.mubr.bf16.mxu0 0
        %664 = vmatmul.mubr.bf16.gmra.mxu0 %v620
        %v665 = vpop.f32.mrf.mxu0
        %v666 = vadd.f32 %v553, %v665
        %v667 = vpop.f32.mrf.mxu0
        %v668 = vpop.f32.mrf.mxu0
        %v669 = vadd.f32 %v556, %v668
        %v670 = vpop.f32.mrf.mxu0
        %671 = vmatprep.mubr.bf16.mxu0 0
        %672 = vmatmul.mubr.bf16.gmra.mxu0 %v623
        %v673 = vpop.f32.mrf.mxu0
        %v674 = vadd.f32 %v561, %v673
        %v675 = vpop.f32.mrf.mxu0
        %v676 = vpop.f32.mrf.mxu0
        %v677 = vadd.f32 %v564, %v676
        %v678 = vpop.f32.mrf.mxu0
        %679 = vmatprep.mubr.bf16.mxu0 0
        %680 = vmatmul.mubr.bf16.gmra.mxu0 %v506
        %v681 = vpop.f32.mrf.mxu0
        %v682 = vadd.f32 %v569, %v681
        %v683 = vpop.f32.mrf.mxu0
        %v684 = vpop.f32.mrf.mxu0
        %v685 = vadd.f32 %v572, %v684
        %v686 = vpop.f32.mrf.mxu0
        %687 = vmatprep.mubr.bf16.mxu0 0
        %688 = vmatmul.mubr.bf16.gmra.mxu0 %v626
        %v689 = vpop.f32.mrf.mxu0
        %v690 = vadd.f32 %v577, %v689
        %v691 = vpop.f32.mrf.mxu0
        %v692 = vpop.f32.mrf.mxu0
        %v693 = vadd.f32 %v580, %v692
        %v694 = vpop.f32.mrf.mxu0
        %695 = vdwg.mxu0
        %v696 = vld [vmem:[%s292 + $0x10] sm:$0x8]
        %v697 = vld [vmem:[%s292 + $0x14] sm:$0xf]
        %v698 = vld [vmem:[%s292 + $0x18] sm:$0xf]
        %v699 = vld [vmem:[%s292 + $0x1c] sm:$0xf]
        %v700 = vld [vmem:[%s292 + $0x20] sm:$0xf]
        %v701 = vld [vmem:[%s292 + $0x24] sm:$0xf]
        %v702 = vld [vmem:[%s292 + $0x28] sm:$0xf]
        %v703 = vld [vmem:[%s292 + $0x2c] sm:$0xf]
        %v704 = vld [vmem:[%s292 + $0x30] sm:$0xf]
        %s705 = scalar_lea.vmem %s2, 12
        %v706 = vld [vmem:[%s705] sm:$0x3]
        %v716 = vunpack.c.l.b16 %v696
        %v717 = vunpack.c.l.b16 %v697
        %v718 = vunpack.c.l.b16 %v698
        %v719 = vunpack.c.l.b16 %v699
        %v720 = vunpack.c.l.b16 %v700
        %v721 = vunpack.c.l.b16 %v701
        %v722 = vunpack.c.l.b16 %v702
        %v723 = vunpack.c.l.b16 %v703
        %v724 = vunpack.c.l.b16 %v704
        %v725 = vpack.c.b16 %v717, %v716
        %v726 = vpack.c.b16 %v719, %v718
        %v727 = vpack.c.b16 %v721, %v720
        %v728 = vpack.c.b16 %v723, %v722
        %v729 = vpack.c.b16 %v724, %v724
        %v731 = vshrl.u32 %v725, 16
        %v733 = vrot.slane %v731, 3
        %v734 = vshll.u32 %v725, 16
        %v736 = vrot.slane %v734, 4
        %v737 = vor.u32 %v733, %v736
        %v739 = vshrl.u32 %v726, 16
        %v741 = vrot.slane %v739, 3
        %v742 = vshll.u32 %v726, 16
        %v744 = vrot.slane %v742, 4
        %v745 = vor.u32 %v741, %v744
        %v746 = vsel %vm456, %v737, %v745
        %v748 = vshrl.u32 %v727, 16
        %v750 = vrot.slane %v748, 3
        %v751 = vshll.u32 %v727, 16
        %v753 = vrot.slane %v751, 4
        %v754 = vor.u32 %v750, %v753
        %v755 = vsel %vm456, %v745, %v754
        %v757 = vshrl.u32 %v728, 16
        %v759 = vrot.slane %v757, 3
        %v760 = vshll.u32 %v728, 16
        %v762 = vrot.slane %v760, 4
        %v763 = vor.u32 %v759, %v762
        %v764 = vsel %vm456, %v754, %v763
        %v766 = vshrl.u32 %v729, 16
        %v768 = vrot.slane %v766, 3
        %v769 = vshll.u32 %v729, 16
        %v771 = vrot.slane %v769, 4
        %v772 = vor.u32 %v768, %v771
        %v773 = vsel %vm456, %v763, %v772
        %v775 = vsel %vm501, %v746, 0
        %v778 = vsel %vm501, %v755, 0
        %v781 = vsel %vm501, %v764, 0
        %v784 = vsel %vm501, %v773, 0
        %v787 = vsel %vm514, %v706, 0
        %789 = vmatprep.subr.bf16.mxu0 0
        %790 = vmatpush1.bf16.msra.mxu0 0
        %791 = vmatprep.subr.bf16.mxu0 0
        %792 = vmatpush1.bf16.msra.mxu0 0
        %793 = vmatprep.subr.bf16.mxu0 0
        %794 = vmatpush1.bf16.msra.mxu0 0
        %795 = vmatprep.subr.bf16.mxu0 0
        %796 = vmatpush1.bf16.msra.mxu0 0
        %797 = vmatprep.subr.bf16.mxu0 0
        %798 = vmatpush1.bf16.msra.mxu0 0
        %799 = vmatprep.subr.bf16.mxu0 0
        %800 = vmatpush1.bf16.msra.mxu0 0
        %801 = vmatprep.subr.bf16.mxu0 0
        %802 = vmatpush1.bf16.msra.mxu0 0
        %803 = vmatprep.subr.bf16.mxu0 0
        %804 = vmatpush1.bf16.msra.mxu0 %v787
        %805 = vmatprep.subr.bf16.mxu0 0
        %806 = vmatpush2.bf16.msra.mxu0 0
        %807 = vmatprep.subr.bf16.mxu0 0
        %808 = vmatpush2.bf16.msra.mxu0 0
        %809 = vmatprep.subr.bf16.mxu0 0
        %810 = vmatpush2.bf16.msra.mxu0 0
        %811 = vmatprep.subr.bf16.mxu0 0
        %812 = vmatpush2.bf16.msra.mxu0 0
        %813 = vmatprep.subr.bf16.mxu0 0
        %814 = vmatpush2.bf16.msra.mxu0 0
        %815 = vmatprep.subr.bf16.mxu0 0
        %816 = vmatpush2.bf16.msra.mxu0 0
        %817 = vmatprep.subr.bf16.mxu0 0
        %818 = vmatpush2.bf16.msra.mxu0 0
        %819 = vmatprep.subr.bf16.mxu0 0
        %820 = vmatpush2.bf16.msra.mxu0 0
        %821 = vmatprep.mubr.bf16.mxu0 0
        %822 = vmatmul.mubr.bf16.gmra.mxu0 %v775
        %v823 = vpop.f32.mrf.mxu0
        %v824 = vadd.f32 0.0, %v823
        %v825 = vpop.f32.mrf.mxu0
        %v826 = vpop.f32.mrf.mxu0
        %v827 = vadd.f32 0.0, %v826
        %v828 = vpop.f32.mrf.mxu0
        %829 = vmatprep.mubr.bf16.mxu0 0
        %830 = vmatmul.mubr.bf16.gmra.mxu0 %v778
        %v831 = vpop.f32.mrf.mxu0
        %v832 = vadd.f32 0.0, %v831
        %v833 = vpop.f32.mrf.mxu0
        %v834 = vpop.f32.mrf.mxu0
        %v835 = vadd.f32 0.0, %v834
        %v836 = vpop.f32.mrf.mxu0
        %837 = vmatprep.mubr.bf16.mxu0 0
        %838 = vmatmul.mubr.bf16.gmra.mxu0 %v781
        %v839 = vpop.f32.mrf.mxu0
        %v840 = vadd.f32 0.0, %v839
        %v841 = vpop.f32.mrf.mxu0
        %v842 = vpop.f32.mrf.mxu0
        %v843 = vadd.f32 0.0, %v842
        %v844 = vpop.f32.mrf.mxu0
        %845 = vmatprep.mubr.bf16.mxu0 0
        %846 = vmatmul.mubr.bf16.gmra.mxu0 %v784
        %v847 = vpop.f32.mrf.mxu0
        %v848 = vadd.f32 0.0, %v847
        %v849 = vpop.f32.mrf.mxu0
        %v850 = vpop.f32.mrf.mxu0
        %v851 = vadd.f32 0.0, %v850
        %v852 = vpop.f32.mrf.mxu0
        %853 = vdwg.mxu0
        %v854 = vadd.f32 %v666, %v824
        %v855 = vadd.f32 %v669, %v827
        %v856 = vadd.f32 %v674, %v832
        %v857 = vadd.f32 %v677, %v835
        %v858 = vadd.f32 %v682, %v840
        %v859 = vadd.f32 %v685, %v843
        %v860 = vadd.f32 %v690, %v848
        %v861 = vadd.f32 %v693, %v851
        %vm862 = vcmp.eq.s32.totalorder %v410, 0
        %vm863 = vcmp.eq.s32.totalorder %v411, 0
        %vm864 = vcmp.eq.s32.totalorder %v412, 0
        %vm865 = vcmp.eq.s32.totalorder %v413, 0
        %vm866 = vcmp.eq.s32.totalorder %v414, 0
        %vm867 = vcmp.eq.s32.totalorder %v415, 0
        %vm868 = vcmp.eq.s32.totalorder %v416, 0
        %vm869 = vcmp.eq.s32.totalorder %v417, 0
        %v870 = vsel %vm862, 1, 0
        %v871 = vsel %vm863, 1, 0
        %v872 = vsel %vm864, 1, 0
        %v873 = vsel %vm865, 1, 0
        %v874 = vsel %vm866, 1, 0
        %v875 = vsel %vm867, 1, 0
        %v876 = vsel %vm868, 1, 0
        %v877 = vsel %vm869, 1, 0
        %vm878 = vcmp.eq.s32.totalorder %v870, 1
        %vm879 = vcmp.eq.s32.totalorder %v871, 1
        %vm880 = vcmp.eq.s32.totalorder %v872, 1
        %vm881 = vcmp.eq.s32.totalorder %v873, 1
        %vm882 = vcmp.eq.s32.totalorder %v874, 1
        %vm883 = vcmp.eq.s32.totalorder %v875, 1
        %vm884 = vcmp.eq.s32.totalorder %v876, 1
        %vm885 = vcmp.eq.s32.totalorder %v877, 1
        %v886 = vsel %vm878, 0.0, %v854
        %v887 = vsel %vm879, 0.0, %v855
        %v888 = vsel %vm880, 0.0, %v856
        %v889 = vsel %vm881, 0.0, %v857
        %v890 = vsel %vm882, 0.0, %v858
        %v891 = vsel %vm883, 0.0, %v859
        %v892 = vsel %vm884, 0.0, %v860
        %v893 = vsel %vm885, 0.0, %v861
        %v894 = vadd.f32 %v886, 0.0
        %v895 = vadd.f32 %v887, 0.0
        %v896 = vadd.f32 %v888, 0.0
        %v897 = vadd.f32 %v889, 0.0
        %v898 = vadd.f32 %v890, 0.0
        %v899 = vadd.f32 %v891, 0.0
        %v900 = vadd.f32 %v892, 0.0
        %v901 = vadd.f32 %v893, 0.0
        %s902 = scalar_lea.vmem %s2, 2
        %v903 = vld [vmem:[%s902] sm:$0x3]
        %s904 = scalar_lea.vmem %s2, 8
        %v905 = vld [vmem:[%s904] sm:$0x3]
        %v906 = vpack.c.b16 %v444, %v443
        %v907 = vpack.c.b16 %v446, %v445
        %v908 = vpack.c.b16 %v448, %v447
        %v909 = vpack.c.b16 %v450, %v449
        %v911 = vsel %vm501, %v906, 0
        %v914 = vsel %vm501, %v907, 0
        %v917 = vsel %vm501, %v908, 0
        %v920 = vsel %vm501, %v909, 0
        %v923 = vsel %vm514, %v905, 0
        %925 = vmatprep.subr.bf16.mxu0 0
        %926 = vmatpush1.bf16.msra.mxu0 0
        %927 = vmatprep.subr.bf16.mxu0 0
        %928 = vmatpush1.bf16.msra.mxu0 0
        %929 = vmatprep.subr.bf16.mxu0 0
        %930 = vmatpush1.bf16.msra.mxu0 0
        %931 = vmatprep.subr.bf16.mxu0 0
        %932 = vmatpush1.bf16.msra.mxu0 0
        %933 = vmatprep.subr.bf16.mxu0 0
        %934 = vmatpush1.bf16.msra.mxu0 0
        %935 = vmatprep.subr.bf16.mxu0 0
        %936 = vmatpush1.bf16.msra.mxu0 0
        %937 = vmatprep.subr.bf16.mxu0 0
        %938 = vmatpush1.bf16.msra.mxu0 0
        %939 = vmatprep.subr.bf16.mxu0 0
        %940 = vmatpush1.bf16.msra.mxu0 %v923
        %941 = vmatprep.subr.bf16.mxu0 0
        %942 = vmatpush2.bf16.msra.mxu0 0
        %943 = vmatprep.subr.bf16.mxu0 0
        %944 = vmatpush2.bf16.msra.mxu0 0
        %945 = vmatprep.subr.bf16.mxu0 0
        %946 = vmatpush2.bf16.msra.mxu0 0
        %947 = vmatprep.subr.bf16.mxu0 0
        %948 = vmatpush2.bf16.msra.mxu0 0
        %949 = vmatprep.subr.bf16.mxu0 0
        %950 = vmatpush2.bf16.msra.mxu0 0
        %951 = vmatprep.subr.bf16.mxu0 0
        %952 = vmatpush2.bf16.msra.mxu0 0
        %953 = vmatprep.subr.bf16.mxu0 0
        %954 = vmatpush2.bf16.msra.mxu0 0
        %955 = vmatprep.subr.bf16.mxu0 0
        %956 = vmatpush2.bf16.msra.mxu0 0
        %957 = vmatprep.mubr.bf16.mxu0 0
        %958 = vmatmul.mubr.bf16.gmra.mxu0 %v911
        %v959 = vpop.f32.mrf.mxu0
        %v960 = vadd.f32 0.0, %v959
        %v961 = vpop.f32.mrf.mxu0
        %v962 = vpop.f32.mrf.mxu0
        %v963 = vadd.f32 0.0, %v962
        %v964 = vpop.f32.mrf.mxu0
        %965 = vmatprep.mubr.bf16.mxu0 0
        %966 = vmatmul.mubr.bf16.gmra.mxu0 %v914
        %v967 = vpop.f32.mrf.mxu0
        %v968 = vadd.f32 0.0, %v967
        %v969 = vpop.f32.mrf.mxu0
        %v970 = vpop.f32.mrf.mxu0
        %v971 = vadd.f32 0.0, %v970
        %v972 = vpop.f32.mrf.mxu0
        %973 = vmatprep.mubr.bf16.mxu0 0
        %974 = vmatmul.mubr.bf16.gmra.mxu0 %v917
        %v975 = vpop.f32.mrf.mxu0
        %v976 = vadd.f32 0.0, %v975
        %v977 = vpop.f32.mrf.mxu0
        %v978 = vpop.f32.mrf.mxu0
        %v979 = vadd.f32 0.0, %v978
        %v980 = vpop.f32.mrf.mxu0
        %981 = vmatprep.mubr.bf16.mxu0 0
        %982 = vmatmul.mubr.bf16.gmra.mxu0 %v920
        %v983 = vpop.f32.mrf.mxu0
        %v984 = vadd.f32 0.0, %v983
        %v985 = vpop.f32.mrf.mxu0
        %v986 = vpop.f32.mrf.mxu0
        %v987 = vadd.f32 0.0, %v986
        %v988 = vpop.f32.mrf.mxu0
        %989 = vdwg.mxu0
        %v990 = vpack.c.b16 %v588, %v587
        %v992 = vsel %vm501, %v990, 0
        %v995 = vsel %vm514, %v903, 0
        %997 = vmatprep.subr.bf16.mxu0 0
        %998 = vmatpush1.bf16.msra.mxu0 0
        %999 = vmatprep.subr.bf16.mxu0 0
        %1000 = vmatpush1.bf16.msra.mxu0 0
        %1001 = vmatprep.subr.bf16.mxu0 0
        %1002 = vmatpush1.bf16.msra.mxu0 0
        %1003 = vmatprep.subr.bf16.mxu0 0
        %1004 = vmatpush1.bf16.msra.mxu0 0
        %1005 = vmatprep.subr.bf16.mxu0 0
        %1006 = vmatpush1.bf16.msra.mxu0 0
        %1007 = vmatprep.subr.bf16.mxu0 0
        %1008 = vmatpush1.bf16.msra.mxu0 0
        %1009 = vmatprep.subr.bf16.mxu0 0
        %1010 = vmatpush1.bf16.msra.mxu0 0
        %1011 = vmatprep.subr.bf16.mxu0 0
        %1012 = vmatpush1.bf16.msra.mxu0 %v995
        %1013 = vmatprep.subr.bf16.mxu0 0
        %1014 = vmatpush2.bf16.msra.mxu0 0
        %1015 = vmatprep.subr.bf16.mxu0 0
        %1016 = vmatpush2.bf16.msra.mxu0 0
        %1017 = vmatprep.subr.bf16.mxu0 0
        %1018 = vmatpush2.bf16.msra.mxu0 0
        %1019 = vmatprep.subr.bf16.mxu0 0
        %1020 = vmatpush2.bf16.msra.mxu0 0
        %1021 = vmatprep.subr.bf16.mxu0 0
        %1022 = vmatpush2.bf16.msra.mxu0 0
        %1023 = vmatprep.subr.bf16.mxu0 0
        %1024 = vmatpush2.bf16.msra.mxu0 0
        %1025 = vmatprep.subr.bf16.mxu0 0
        %1026 = vmatpush2.bf16.msra.mxu0 0
        %1027 = vmatprep.subr.bf16.mxu0 0
        %1028 = vmatpush2.bf16.msra.mxu0 0
        %1029 = vmatprep.mubr.bf16.mxu0 0
        %1030 = vmatmul.mubr.bf16.gmra.mxu0 %v992
        %v1031 = vpop.f32.mrf.mxu0
        %v1032 = vadd.f32 %v960, %v1031
        %v1033 = vpop.f32.mrf.mxu0
        %v1034 = vpop.f32.mrf.mxu0
        %v1035 = vadd.f32 %v963, %v1034
        %v1036 = vpop.f32.mrf.mxu0
        %1037 = vmatprep.mubr.bf16.mxu0 0
        %1038 = vmatmul.mubr.bf16.gmra.mxu0 %v911
        %v1039 = vpop.f32.mrf.mxu0
        %v1040 = vadd.f32 %v968, %v1039
        %v1041 = vpop.f32.mrf.mxu0
        %v1042 = vpop.f32.mrf.mxu0
        %v1043 = vadd.f32 %v971, %v1042
        %v1044 = vpop.f32.mrf.mxu0
        %1045 = vmatprep.mubr.bf16.mxu0 0
        %1046 = vmatmul.mubr.bf16.gmra.mxu0 %v914
        %v1047 = vpop.f32.mrf.mxu0
        %v1048 = vadd.f32 %v976, %v1047
        %v1049 = vpop.f32.mrf.mxu0
        %v1050 = vpop.f32.mrf.mxu0
        %v1051 = vadd.f32 %v979, %v1050
        %v1052 = vpop.f32.mrf.mxu0
        %1053 = vmatprep.mubr.bf16.mxu0 0
        %1054 = vmatmul.mubr.bf16.gmra.mxu0 %v917
        %v1055 = vpop.f32.mrf.mxu0
        %v1056 = vadd.f32 %v984, %v1055
        %v1057 = vpop.f32.mrf.mxu0
        %v1058 = vpop.f32.mrf.mxu0
        %v1059 = vadd.f32 %v987, %v1058
        %v1060 = vpop.f32.mrf.mxu0
        %1061 = vdwg.mxu0
        %s1062 = scalar_lea.vmem %s2, 14
        %v1063 = vld [vmem:[%s1062] sm:$0x3]
        %v1064 = vpack.c.b16 %v718, %v717
        %v1065 = vpack.c.b16 %v720, %v719
        %v1066 = vpack.c.b16 %v722, %v721
        %v1067 = vpack.c.b16 %v724, %v723
        %v1069 = vsel %vm501, %v1064, 0
        %v1072 = vsel %vm501, %v1065, 0
        %v1075 = vsel %vm501, %v1066, 0
        %v1078 = vsel %vm501, %v1067, 0
        %v1081 = vsel %vm514, %v1063, 0
        %1083 = vmatprep.subr.bf16.mxu0 0
        %1084 = vmatpush1.bf16.msra.mxu0 0
        %1085 = vmatprep.subr.bf16.mxu0 0
        %1086 = vmatpush1.bf16.msra.mxu0 0
        %1087 = vmatprep.subr.bf16.mxu0 0
        %1088 = vmatpush1.bf16.msra.mxu0 0
        %1089 = vmatprep.subr.bf16.mxu0 0
        %1090 = vmatpush1.bf16.msra.mxu0 0
        %1091 = vmatprep.subr.bf16.mxu0 0
        %1092 = vmatpush1.bf16.msra.mxu0 0
        %1093 = vmatprep.subr.bf16.mxu0 0
        %1094 = vmatpush1.bf16.msra.mxu0 0
        %1095 = vmatprep.subr.bf16.mxu0 0
        %1096 = vmatpush1.bf16.msra.mxu0 0
        %1097 = vmatprep.subr.bf16.mxu0 0
        %1098 = vmatpush1.bf16.msra.mxu0 %v1081
        %1099 = vmatprep.subr.bf16.mxu0 0
        %1100 = vmatpush2.bf16.msra.mxu0 0
        %1101 = vmatprep.subr.bf16.mxu0 0
        %1102 = vmatpush2.bf16.msra.mxu0 0
        %1103 = vmatprep.subr.bf16.mxu0 0
        %1104 = vmatpush2.bf16.msra.mxu0 0
        %1105 = vmatprep.subr.bf16.mxu0 0
        %1106 = vmatpush2.bf16.msra.mxu0 0
        %1107 = vmatprep.subr.bf16.mxu0 0
        %1108 = vmatpush2.bf16.msra.mxu0 0
        %1109 = vmatprep.subr.bf16.mxu0 0
        %1110 = vmatpush2.bf16.msra.mxu0 0
        %1111 = vmatprep.subr.bf16.mxu0 0
        %1112 = vmatpush2.bf16.msra.mxu0 0
        %1113 = vmatprep.subr.bf16.mxu0 0
        %1114 = vmatpush2.bf16.msra.mxu0 0
        %1115 = vmatprep.mubr.bf16.mxu0 0
        %1116 = vmatmul.mubr.bf16.gmra.mxu0 %v1069
        %v1117 = vpop.f32.mrf.mxu0
        %v1118 = vadd.f32 0.0, %v1117
        %v1119 = vpop.f32.mrf.mxu0
        %v1120 = vpop.f32.mrf.mxu0
        %v1121 = vadd.f32 0.0, %v1120
        %v1122 = vpop.f32.mrf.mxu0
        %1123 = vmatprep.mubr.bf16.mxu0 0
        %1124 = vmatmul.mubr.bf16.gmra.mxu0 %v1072
        %v1125 = vpop.f32.mrf.mxu0
        %v1126 = vadd.f32 0.0, %v1125
        %v1127 = vpop.f32.mrf.mxu0
        %v1128 = vpop.f32.mrf.mxu0
        %v1129 = vadd.f32 0.0, %v1128
        %v1130 = vpop.f32.mrf.mxu0
        %1131 = vmatprep.mubr.bf16.mxu0 0
        %1132 = vmatmul.mubr.bf16.gmra.mxu0 %v1075
        %v1133 = vpop.f32.mrf.mxu0
        %v1134 = vadd.f32 0.0, %v1133
        %v1135 = vpop.f32.mrf.mxu0
        %v1136 = vpop.f32.mrf.mxu0
        %v1137 = vadd.f32 0.0, %v1136
        %v1138 = vpop.f32.mrf.mxu0
        %1139 = vmatprep.mubr.bf16.mxu0 0
        %1140 = vmatmul.mubr.bf16.gmra.mxu0 %v1078
        %v1141 = vpop.f32.mrf.mxu0
        %v1142 = vadd.f32 0.0, %v1141
        %v1143 = vpop.f32.mrf.mxu0
        %v1144 = vpop.f32.mrf.mxu0
        %v1145 = vadd.f32 0.0, %v1144
        %v1146 = vpop.f32.mrf.mxu0
        %1147 = vdwg.mxu0
        %v1148 = vadd.f32 %v1032, %v1118
        %v1149 = vadd.f32 %v1035, %v1121
        %v1150 = vadd.f32 %v1040, %v1126
        %v1151 = vadd.f32 %v1043, %v1129
        %v1152 = vadd.f32 %v1048, %v1134
        %v1153 = vadd.f32 %v1051, %v1137
        %v1154 = vadd.f32 %v1056, %v1142
        %v1155 = vadd.f32 %v1059, %v1145
        %v1156 = vadd.f32 %v894, %v1148
        %v1157 = vadd.f32 %v895, %v1149
        %v1158 = vadd.f32 %v896, %v1150
        %v1159 = vadd.f32 %v897, %v1151
        %v1160 = vadd.f32 %v898, %v1152
        %v1161 = vadd.f32 %v899, %v1153
        %v1162 = vadd.f32 %v900, %v1154
        %v1163 = vadd.f32 %v901, %v1155
        %v1164 = vld [vmem:[%s292 + $0x4] sm:$0xf]
        %v1165 = vld [vmem:[%s292 + $0x8] sm:$0xf]
        %v1166 = vld [vmem:[%s292 + $0xc] sm:$0xf]
        %v1167 = vld [vmem:[%s292 + $0x10] sm:$0xf]
        %v1168 = vld [vmem:[%s292 + $0x14] sm:$0xf]
        %v1169 = vld [vmem:[%s292 + $0x18] sm:$0xf]
        %v1170 = vld [vmem:[%s292 + $0x1c] sm:$0xf]
        %v1171 = vld [vmem:[%s292 + $0x20] sm:$0xf]
        %v1172 = vld [vmem:[%s292 + $0x24] sm:$0x1]
        %s1173 = scalar_lea.vmem %s2, 4
        %v1174 = vld [vmem:[%s1173] sm:$0x3]
        %v1175 = vld [vmem:[%s292 + $0x24] sm:$0xf]
        %v1176 = vld [vmem:[%s292 + $0x28] sm:$0xf]
        %v1177 = vld [vmem:[%s292 + $0x2c] sm:$0x1]
        %s1178 = scalar_lea.vmem %s2, 10
        %v1179 = vld [vmem:[%s1178] sm:$0x3]
        %v1189 = vunpack.c.l.b16 %v1166
        %v1190 = vunpack.c.l.b16 %v1167
        %v1191 = vunpack.c.l.b16 %v1168
        %v1192 = vunpack.c.l.b16 %v1169
        %v1193 = vunpack.c.l.b16 %v1170
        %v1194 = vunpack.c.l.b16 %v1171
        %v1195 = vunpack.c.l.b16 %v1175
        %v1196 = vunpack.c.l.b16 %v1176
        %v1197 = vunpack.c.l.b16 %v1177
        %v1198 = vpack.c.b16 %v1190, %v1189
        %v1199 = vpack.c.b16 %v1192, %v1191
        %v1200 = vpack.c.b16 %v1194, %v1193
        %v1201 = vpack.c.b16 %v1196, %v1195
        %v1202 = vpack.c.b16 %v1197, %v1197
        %vm1203 = vsmask.f32 7424
        %v1205 = vshrl.u32 %v1198, 16
        %v1207 = vshll.u32 %v1198, 16
        %v1209 = vrot.slane %v1207, 1
        %v1210 = vor.u32 %v1205, %v1209
        %v1212 = vshll.u32 %v1199, 16
        %v1214 = vrot.slane %v1212, 1
        %v1215 = vsel %vm1203, %v1210, %v1214
        %v1216 = vshrl.u32 %v1199, 16
        %v1218 = vor.u32 %v1216, %v1214
        %v1220 = vshll.u32 %v1200, 16
        %v1222 = vrot.slane %v1220, 1
        %v1223 = vsel %vm1203, %v1218, %v1222
        %v1224 = vshrl.u32 %v1200, 16
        %v1226 = vor.u32 %v1224, %v1222
        %v1228 = vshll.u32 %v1201, 16
        %v1230 = vrot.slane %v1228, 1
        %v1231 = vsel %vm1203, %v1226, %v1230
        %v1232 = vshrl.u32 %v1201, 16
        %v1234 = vor.u32 %v1232, %v1230
        %v1236 = vshll.u32 %v1202, 16
        %v1238 = vrot.slane %v1236, 1
        %v1239 = vsel %vm1203, %v1234, %v1238
        %v1241 = vsel %vm501, %v1215, 0
        %v1244 = vsel %vm501, %v1223, 0
        %v1247 = vsel %vm501, %v1231, 0
        %v1250 = vsel %vm501, %v1239, 0
        %v1253 = vsel %vm514, %v1179, 0
        %1255 = vmatprep.subr.bf16.mxu0 0
        %1256 = vmatpush1.bf16.msra.mxu0 0
        %1257 = vmatprep.subr.bf16.mxu0 0
        %1258 = vmatpush1.bf16.msra.mxu0 0
        %1259 = vmatprep.subr.bf16.mxu0 0
        %1260 = vmatpush1.bf16.msra.mxu0 0
        %1261 = vmatprep.subr.bf16.mxu0 0
        %1262 = vmatpush1.bf16.msra.mxu0 0
        %1263 = vmatprep.subr.bf16.mxu0 0
        %1264 = vmatpush1.bf16.msra.mxu0 0
        %1265 = vmatprep.subr.bf16.mxu0 0
        %1266 = vmatpush1.bf16.msra.mxu0 0
        %1267 = vmatprep.subr.bf16.mxu0 0
        %1268 = vmatpush1.bf16.msra.mxu0 0
        %1269 = vmatprep.subr.bf16.mxu0 0
        %1270 = vmatpush1.bf16.msra.mxu0 %v1253
        %1271 = vmatprep.subr.bf16.mxu0 0
        %1272 = vmatpush2.bf16.msra.mxu0 0
        %1273 = vmatprep.subr.bf16.mxu0 0
        %1274 = vmatpush2.bf16.msra.mxu0 0
        %1275 = vmatprep.subr.bf16.mxu0 0
        %1276 = vmatpush2.bf16.msra.mxu0 0
        %1277 = vmatprep.subr.bf16.mxu0 0
        %1278 = vmatpush2.bf16.msra.mxu0 0
        %1279 = vmatprep.subr.bf16.mxu0 0
        %1280 = vmatpush2.bf16.msra.mxu0 0
        %1281 = vmatprep.subr.bf16.mxu0 0
        %1282 = vmatpush2.bf16.msra.mxu0 0
        %1283 = vmatprep.subr.bf16.mxu0 0
        %1284 = vmatpush2.bf16.msra.mxu0 0
        %1285 = vmatprep.subr.bf16.mxu0 0
        %1286 = vmatpush2.bf16.msra.mxu0 0
        %1287 = vmatprep.mubr.bf16.mxu0 0
        %1288 = vmatmul.mubr.bf16.gmra.mxu0 %v1241
        %v1289 = vpop.f32.mrf.mxu0
        %v1290 = vadd.f32 0.0, %v1289
        %v1291 = vpop.f32.mrf.mxu0
        %v1292 = vpop.f32.mrf.mxu0
        %v1293 = vadd.f32 0.0, %v1292
        %v1294 = vpop.f32.mrf.mxu0
        %1295 = vmatprep.mubr.bf16.mxu0 0
        %1296 = vmatmul.mubr.bf16.gmra.mxu0 %v1244
        %v1297 = vpop.f32.mrf.mxu0
        %v1298 = vadd.f32 0.0, %v1297
        %v1299 = vpop.f32.mrf.mxu0
        %v1300 = vpop.f32.mrf.mxu0
        %v1301 = vadd.f32 0.0, %v1300
        %v1302 = vpop.f32.mrf.mxu0
        %1303 = vmatprep.mubr.bf16.mxu0 0
        %1304 = vmatmul.mubr.bf16.gmra.mxu0 %v1247
        %v1305 = vpop.f32.mrf.mxu0
        %v1306 = vadd.f32 0.0, %v1305
        %v1307 = vpop.f32.mrf.mxu0
        %v1308 = vpop.f32.mrf.mxu0
        %v1309 = vadd.f32 0.0, %v1308
        %v1310 = vpop.f32.mrf.mxu0
        %1311 = vmatprep.mubr.bf16.mxu0 0
        %1312 = vmatmul.mubr.bf16.gmra.mxu0 %v1250
        %v1313 = vpop.f32.mrf.mxu0
        %v1314 = vadd.f32 0.0, %v1313
        %v1315 = vpop.f32.mrf.mxu0
        %v1316 = vpop.f32.mrf.mxu0
        %v1317 = vadd.f32 0.0, %v1316
        %v1318 = vpop.f32.mrf.mxu0
        %1319 = vdwg.mxu0
        %v1323 = vunpack.c.l.b16 %v1164
        %v1324 = vunpack.c.l.b16 %v1165
        %v1325 = vunpack.c.l.b16 %v1172
        %v1326 = vpack.c.b16 %v1324, %v1323
        %v1327 = vpack.c.b16 %v1325, %v1325
        %v1329 = vshrl.u32 %v1326, 16
        %v1331 = vshll.u32 %v1326, 16
        %v1333 = vrot.slane %v1331, 1
        %v1334 = vor.u32 %v1329, %v1333
        %v1335 = vsel %vm1203, %v1334, %v1209
        %v1337 = vshll.u32 %v1327, 16
        %v1339 = vrot.slane %v1337, 1
        %v1340 = vsel %vm1203, %v1226, %v1339
        %v1342 = vsel %vm501, %v1335, 0
        %v1345 = vsel %vm501, %v1340, 0
        %v1348 = vsel %vm514, %v1174, 0
        %1350 = vmatprep.subr.bf16.mxu0 0
        %1351 = vmatpush1.bf16.msra.mxu0 0
        %1352 = vmatprep.subr.bf16.mxu0 0
        %1353 = vmatpush1.bf16.msra.mxu0 0
        %1354 = vmatprep.subr.bf16.mxu0 0
        %1355 = vmatpush1.bf16.msra.mxu0 0
        %1356 = vmatprep.subr.bf16.mxu0 0
        %1357 = vmatpush1.bf16.msra.mxu0 0
        %1358 = vmatprep.subr.bf16.mxu0 0
        %1359 = vmatpush1.bf16.msra.mxu0 0
        %1360 = vmatprep.subr.bf16.mxu0 0
        %1361 = vmatpush1.bf16.msra.mxu0 0
        %1362 = vmatprep.subr.bf16.mxu0 0
        %1363 = vmatpush1.bf16.msra.mxu0 0
        %1364 = vmatprep.subr.bf16.mxu0 0
        %1365 = vmatpush1.bf16.msra.mxu0 %v1348
        %1366 = vmatprep.subr.bf16.mxu0 0
        %1367 = vmatpush2.bf16.msra.mxu0 0
        %1368 = vmatprep.subr.bf16.mxu0 0
        %1369 = vmatpush2.bf16.msra.mxu0 0
        %1370 = vmatprep.subr.bf16.mxu0 0
        %1371 = vmatpush2.bf16.msra.mxu0 0
        %1372 = vmatprep.subr.bf16.mxu0 0
        %1373 = vmatpush2.bf16.msra.mxu0 0
        %1374 = vmatprep.subr.bf16.mxu0 0
        %1375 = vmatpush2.bf16.msra.mxu0 0
        %1376 = vmatprep.subr.bf16.mxu0 0
        %1377 = vmatpush2.bf16.msra.mxu0 0
        %1378 = vmatprep.subr.bf16.mxu0 0
        %1379 = vmatpush2.bf16.msra.mxu0 0
        %1380 = vmatprep.subr.bf16.mxu0 0
        %1381 = vmatpush2.bf16.msra.mxu0 0
        %1382 = vmatprep.mubr.bf16.mxu0 0
        %1383 = vmatmul.mubr.bf16.gmra.mxu0 %v1342
        %v1384 = vpop.f32.mrf.mxu0
        %v1385 = vadd.f32 %v1290, %v1384
        %v1386 = vpop.f32.mrf.mxu0
        %v1387 = vpop.f32.mrf.mxu0
        %v1388 = vadd.f32 %v1293, %v1387
        %v1389 = vpop.f32.mrf.mxu0
        %1390 = vmatprep.mubr.bf16.mxu0 0
        %1391 = vmatmul.mubr.bf16.gmra.mxu0 %v1241
        %v1392 = vpop.f32.mrf.mxu0
        %v1393 = vadd.f32 %v1298, %v1392
        %v1394 = vpop.f32.mrf.mxu0
        %v1395 = vpop.f32.mrf.mxu0
        %v1396 = vadd.f32 %v1301, %v1395
        %v1397 = vpop.f32.mrf.mxu0
        %1398 = vmatprep.mubr.bf16.mxu0 0
        %1399 = vmatmul.mubr.bf16.gmra.mxu0 %v1244
        %v1400 = vpop.f32.mrf.mxu0
        %v1401 = vadd.f32 %v1306, %v1400
        %v1402 = vpop.f32.mrf.mxu0
        %v1403 = vpop.f32.mrf.mxu0
        %v1404 = vadd.f32 %v1309, %v1403
        %v1405 = vpop.f32.mrf.mxu0
        %1406 = vmatprep.mubr.bf16.mxu0 0
        %1407 = vmatmul.mubr.bf16.gmra.mxu0 %v1345
        %v1408 = vpop.f32.mrf.mxu0
        %v1409 = vadd.f32 %v1314, %v1408
        %v1410 = vpop.f32.mrf.mxu0
        %v1411 = vpop.f32.mrf.mxu0
        %v1412 = vadd.f32 %v1317, %v1411
        %v1413 = vpop.f32.mrf.mxu0
        %1414 = vdwg.mxu0
        %v1415 = vld [vmem:[%s292 + $0x14] sm:$0xf]
        %v1416 = vld [vmem:[%s292 + $0x18] sm:$0xf]
        %v1417 = vld [vmem:[%s292 + $0x1c] sm:$0xf]
        %v1418 = vld [vmem:[%s292 + $0x20] sm:$0xf]
        %v1419 = vld [vmem:[%s292 + $0x24] sm:$0xf]
        %v1420 = vld [vmem:[%s292 + $0x28] sm:$0xf]
        %v1421 = vld [vmem:[%s292 + $0x2c] sm:$0xf]
        %v1422 = vld [vmem:[%s292 + $0x30] sm:$0xf]
        %v1423 = vld [vmem:[%s292 + $0x34] sm:$0x1]
        %s1424 = scalar_lea.vmem %s2, 16
        %v1425 = vld [vmem:[%s1424] sm:$0x3]
        %v1435 = vunpack.c.l.b16 %v1415
        %v1436 = vunpack.c.l.b16 %v1416
        %v1437 = vunpack.c.l.b16 %v1417
        %v1438 = vunpack.c.l.b16 %v1418
        %v1439 = vunpack.c.l.b16 %v1419
        %v1440 = vunpack.c.l.b16 %v1420
        %v1441 = vunpack.c.l.b16 %v1421
        %v1442 = vunpack.c.l.b16 %v1422
        %v1443 = vunpack.c.l.b16 %v1423
        %v1444 = vpack.c.b16 %v1436, %v1435
        %v1445 = vpack.c.b16 %v1438, %v1437
        %v1446 = vpack.c.b16 %v1440, %v1439
        %v1447 = vpack.c.b16 %v1442, %v1441
        %v1448 = vpack.c.b16 %v1443, %v1443
        %v1450 = vshrl.u32 %v1444, 16
        %v1452 = vshll.u32 %v1444, 16
        %v1454 = vrot.slane %v1452, 1
        %v1455 = vor.u32 %v1450, %v1454
        %v1457 = vshll.u32 %v1445, 16
        %v1459 = vrot.slane %v1457, 1
        %v1460 = vsel %vm1203, %v1455, %v1459
        %v1461 = vshrl.u32 %v1445, 16
        %v1463 = vor.u32 %v1461, %v1459
        %v1465 = vshll.u32 %v1446, 16
        %v1467 = vrot.slane %v1465, 1
        %v1468 = vsel %vm1203, %v1463, %v1467
        %v1469 = vshrl.u32 %v1446, 16
        %v1471 = vor.u32 %v1469, %v1467
        %v1473 = vshll.u32 %v1447, 16
        %v1475 = vrot.slane %v1473, 1
        %v1476 = vsel %vm1203, %v1471, %v1475
        %v1477 = vshrl.u32 %v1447, 16
        %v1479 = vor.u32 %v1477, %v1475
        %v1481 = vshll.u32 %v1448, 16
        %v1483 = vrot.slane %v1481, 1
        %v1484 = vsel %vm1203, %v1479, %v1483
        %v1486 = vsel %vm501, %v1460, 0
        %v1489 = vsel %vm501, %v1468, 0
        %v1492 = vsel %vm501, %v1476, 0
        %v1495 = vsel %vm501, %v1484, 0
        %v1498 = vsel %vm514, %v1425, 0
        %1500 = vmatprep.subr.bf16.mxu0 0
        %1501 = vmatpush1.bf16.msra.mxu0 0
        %1502 = vmatprep.subr.bf16.mxu0 0
        %1503 = vmatpush1.bf16.msra.mxu0 0
        %1504 = vmatprep.subr.bf16.mxu0 0
        %1505 = vmatpush1.bf16.msra.mxu0 0
        %1506 = vmatprep.subr.bf16.mxu0 0
        %1507 = vmatpush1.bf16.msra.mxu0 0
        %1508 = vmatprep.subr.bf16.mxu0 0
        %1509 = vmatpush1.bf16.msra.mxu0 0
        %1510 = vmatprep.subr.bf16.mxu0 0
        %1511 = vmatpush1.bf16.msra.mxu0 0
        %1512 = vmatprep.subr.bf16.mxu0 0
        %1513 = vmatpush1.bf16.msra.mxu0 0
        %1514 = vmatprep.subr.bf16.mxu0 0
        %1515 = vmatpush1.bf16.msra.mxu0 %v1498
        %1516 = vmatprep.subr.bf16.mxu0 0
        %1517 = vmatpush2.bf16.msra.mxu0 0
        %1518 = vmatprep.subr.bf16.mxu0 0
        %1519 = vmatpush2.bf16.msra.mxu0 0
        %1520 = vmatprep.subr.bf16.mxu0 0
        %1521 = vmatpush2.bf16.msra.mxu0 0
        %1522 = vmatprep.subr.bf16.mxu0 0
        %1523 = vmatpush2.bf16.msra.mxu0 0
        %1524 = vmatprep.subr.bf16.mxu0 0
        %1525 = vmatpush2.bf16.msra.mxu0 0
        %1526 = vmatprep.subr.bf16.mxu0 0
        %1527 = vmatpush2.bf16.msra.mxu0 0
        %1528 = vmatprep.subr.bf16.mxu0 0
        %1529 = vmatpush2.bf16.msra.mxu0 0
        %1530 = vmatprep.subr.bf16.mxu0 0
        %1531 = vmatpush2.bf16.msra.mxu0 0
        %1532 = vmatprep.mubr.bf16.mxu0 0
        %1533 = vmatmul.mubr.bf16.gmra.mxu0 %v1486
        %v1534 = vpop.f32.mrf.mxu0
        %v1535 = vadd.f32 0.0, %v1534
        %v1536 = vpop.f32.mrf.mxu0
        %v1537 = vpop.f32.mrf.mxu0
        %v1538 = vadd.f32 0.0, %v1537
        %v1539 = vpop.f32.mrf.mxu0
        %1540 = vmatprep.mubr.bf16.mxu0 0
        %1541 = vmatmul.mubr.bf16.gmra.mxu0 %v1489
        %v1542 = vpop.f32.mrf.mxu0
        %v1543 = vadd.f32 0.0, %v1542
        %v1544 = vpop.f32.mrf.mxu0
        %v1545 = vpop.f32.mrf.mxu0
        %v1546 = vadd.f32 0.0, %v1545
        %v1547 = vpop.f32.mrf.mxu0
        %1548 = vmatprep.mubr.bf16.mxu0 0
        %1549 = vmatmul.mubr.bf16.gmra.mxu0 %v1492
        %v1550 = vpop.f32.mrf.mxu0
        %v1551 = vadd.f32 0.0, %v1550
        %v1552 = vpop.f32.mrf.mxu0
        %v1553 = vpop.f32.mrf.mxu0
        %v1554 = vadd.f32 0.0, %v1553
        %v1555 = vpop.f32.mrf.mxu0
        %1556 = vmatprep.mubr.bf16.mxu0 0
        %1557 = vmatmul.mubr.bf16.gmra.mxu0 %v1495
        %v1558 = vpop.f32.mrf.mxu0
        %v1559 = vadd.f32 0.0, %v1558
        %v1560 = vpop.f32.mrf.mxu0
        %v1561 = vpop.f32.mrf.mxu0
        %v1562 = vadd.f32 0.0, %v1561
        %v1563 = vpop.f32.mrf.mxu0
        %1564 = vdwg.mxu0
        %v1565 = vadd.f32 %v1385, %v1535
        %v1566 = vadd.f32 %v1388, %v1538
        %v1567 = vadd.f32 %v1393, %v1543
        %v1568 = vadd.f32 %v1396, %v1546
        %v1569 = vadd.f32 %v1401, %v1551
        %v1570 = vadd.f32 %v1404, %v1554
        %v1571 = vadd.f32 %v1409, %v1559
        %v1572 = vadd.f32 %v1412, %v1562
        %vm1573 = vcmp.eq.s32.totalorder %v410, 15
        %vm1574 = vcmp.eq.s32.totalorder %v411, 15
        %vm1575 = vcmp.eq.s32.totalorder %v412, 15
        %vm1576 = vcmp.eq.s32.totalorder %v413, 15
        %vm1577 = vcmp.eq.s32.totalorder %v414, 15
        %vm1578 = vcmp.eq.s32.totalorder %v415, 15
        %vm1579 = vcmp.eq.s32.totalorder %v416, 15
        %vm1580 = vcmp.eq.s32.totalorder %v417, 15
        %v1581 = vsel %vm1573, 1, 0
        %v1582 = vsel %vm1574, 1, 0
        %v1583 = vsel %vm1575, 1, 0
        %v1584 = vsel %vm1576, 1, 0
        %v1585 = vsel %vm1577, 1, 0
        %v1586 = vsel %vm1578, 1, 0
        %v1587 = vsel %vm1579, 1, 0
        %v1588 = vsel %vm1580, 1, 0
        %vm1589 = vcmp.eq.s32.totalorder %v1581, 1
        %vm1590 = vcmp.eq.s32.totalorder %v1582, 1
        %vm1591 = vcmp.eq.s32.totalorder %v1583, 1
        %vm1592 = vcmp.eq.s32.totalorder %v1584, 1
        %vm1593 = vcmp.eq.s32.totalorder %v1585, 1
        %vm1594 = vcmp.eq.s32.totalorder %v1586, 1
        %vm1595 = vcmp.eq.s32.totalorder %v1587, 1
        %vm1596 = vcmp.eq.s32.totalorder %v1588, 1
        %v1597 = vsel %vm1589, 0.0, %v1565
        %v1598 = vsel %vm1590, 0.0, %v1566
        %v1599 = vsel %vm1591, 0.0, %v1567
        %v1600 = vsel %vm1592, 0.0, %v1568
        %v1601 = vsel %vm1593, 0.0, %v1569
        %v1602 = vsel %vm1594, 0.0, %v1570
        %v1603 = vsel %vm1595, 0.0, %v1571
        %v1604 = vsel %vm1596, 0.0, %v1572
        %v1605 = vadd.f32 %v1156, %v1597
        %v1606 = vadd.f32 %v1157, %v1598
        %v1607 = vadd.f32 %v1158, %v1599
        %v1608 = vadd.f32 %v1159, %v1600
        %v1609 = vadd.f32 %v1160, %v1601
        %v1610 = vadd.f32 %v1161, %v1602
        %v1611 = vadd.f32 %v1162, %v1603
        %v1612 = vadd.f32 %v1163, %v1604
        %v1613 = vpack.c.bf16 %v1606, %v1605
        %v1614 = vpack.c.bf16 %v1608, %v1607
        %v1615 = vpack.c.bf16 %v1610, %v1609
        %v1616 = vpack.c.bf16 %v1612, %v1611
        %v1617 = vld [vmem:[%s3] sm:$0x3]
        %v1618 = vld [vmem:[%s4] sm:$0xf]
        %v1619 = vld [vmem:[%s4 + $0x4] sm:$0xf]
        %v1622 = vunpack.c.l.b16 %v1618
        %v1623 = vunpack.c.l.b16 %v1619
        %v1624 = vpack.c.b16 %v1623, %v1622
        %vm1626 = vcmask 130048
        %v1628 = vsel %vm1626, %v309, 0
        %v1631 = vsel %vm1626, %v310, 0
        %v1634 = vsel %vm1626, %v311, 0
        %v1637 = vsel %vm1626, %v312, 0
        %1639 = vmatprep.subr.bf16.mxu0 0
        %1640 = vmatpush1.bf16.msra.mxu0 0
        %1641 = vmatprep.subr.bf16.mxu0 0
        %1642 = vmatpush1.bf16.msra.mxu0 0
        %1643 = vmatprep.subr.bf16.mxu0 0
        %1644 = vmatpush1.bf16.msra.mxu0 0
        %1645 = vmatprep.subr.bf16.mxu0 0
        %1646 = vmatpush1.bf16.msra.mxu0 0
        %1647 = vmatprep.subr.bf16.mxu0 0
        %1648 = vmatpush1.bf16.msra.mxu0 0
        %1649 = vmatprep.subr.bf16.mxu0 0
        %1650 = vmatpush1.bf16.msra.mxu0 0
        %1651 = vmatprep.subr.bf16.mxu0 0
        %1652 = vmatpush1.bf16.msra.mxu0 0
        %1653 = vmatprep.subr.bf16.mxu0 0
        %1654 = vmatpush1.bf16.msra.mxu0 %v1624
        %1655 = vmatprep.subr.bf16.mxu0 0
        %1656 = vmatpush2.bf16.msra.mxu0 0
        %1657 = vmatprep.subr.bf16.mxu0 0
        %1658 = vmatpush2.bf16.msra.mxu0 0
        %1659 = vmatprep.subr.bf16.mxu0 0
        %1660 = vmatpush2.bf16.msra.mxu0 0
        %1661 = vmatprep.subr.bf16.mxu0 0
        %1662 = vmatpush2.bf16.msra.mxu0 0
        %1663 = vmatprep.subr.bf16.mxu0 0
        %1664 = vmatpush2.bf16.msra.mxu0 0
        %1665 = vmatprep.subr.bf16.mxu0 0
        %1666 = vmatpush2.bf16.msra.mxu0 0
        %1667 = vmatprep.subr.bf16.mxu0 0
        %1668 = vmatpush2.bf16.msra.mxu0 0
        %1669 = vmatprep.subr.bf16.mxu0 0
        %1670 = vmatpush2.bf16.msra.mxu0 0
        %1671 = vmatprep.mubr.bf16.mxu0 0
        %1672 = vmatmul.mubr.bf16.gmra.mxu0 %v1628
        %v1673 = vpop.f32.mrf.mxu0
        %v1674 = vadd.f32 0.0, %v1673
        %v1675 = vpop.f32.mrf.mxu0
        %v1676 = vpop.f32.mrf.mxu0
        %v1677 = vadd.f32 0.0, %v1676
        %v1678 = vpop.f32.mrf.mxu0
        %1679 = vmatprep.mubr.bf16.mxu0 0
        %1680 = vmatmul.mubr.bf16.gmra.mxu0 %v1631
        %v1681 = vpop.f32.mrf.mxu0
        %v1682 = vadd.f32 0.0, %v1681
        %v1683 = vpop.f32.mrf.mxu0
        %v1684 = vpop.f32.mrf.mxu0
        %v1685 = vadd.f32 0.0, %v1684
        %v1686 = vpop.f32.mrf.mxu0
        %1687 = vmatprep.mubr.bf16.mxu0 0
        %1688 = vmatmul.mubr.bf16.gmra.mxu0 %v1634
        %v1689 = vpop.f32.mrf.mxu0
        %v1690 = vadd.f32 0.0, %v1689
        %v1691 = vpop.f32.mrf.mxu0
        %v1692 = vpop.f32.mrf.mxu0
        %v1693 = vadd.f32 0.0, %v1692
        %v1694 = vpop.f32.mrf.mxu0
        %1695 = vmatprep.mubr.bf16.mxu0 0
        %1696 = vmatmul.mubr.bf16.gmra.mxu0 %v1637
        %v1697 = vpop.f32.mrf.mxu0
        %v1698 = vadd.f32 0.0, %v1697
        %v1699 = vpop.f32.mrf.mxu0
        %v1700 = vpop.f32.mrf.mxu0
        %v1701 = vadd.f32 0.0, %v1700
        %v1702 = vpop.f32.mrf.mxu0
        %1703 = vdwg.mxu0
        %v1705 = vsel %vm501, %v1613, 0
        %v1708 = vsel %vm501, %v1614, 0
        %v1711 = vsel %vm501, %v1615, 0
        %v1714 = vsel %vm501, %v1616, 0
        %v1717 = vsel %vm514, %v1617, 0
        %1719 = vmatprep.subr.bf16.mxu0 0
        %1720 = vmatpush1.bf16.msra.mxu0 0
        %1721 = vmatprep.subr.bf16.mxu0 0
        %1722 = vmatpush1.bf16.msra.mxu0 0
        %1723 = vmatprep.subr.bf16.mxu0 0
        %1724 = vmatpush1.bf16.msra.mxu0 0
        %1725 = vmatprep.subr.bf16.mxu0 0
        %1726 = vmatpush1.bf16.msra.mxu0 0
        %1727 = vmatprep.subr.bf16.mxu0 0
        %1728 = vmatpush1.bf16.msra.mxu0 0
        %1729 = vmatprep.subr.bf16.mxu0 0
        %1730 = vmatpush1.bf16.msra.mxu0 0
        %1731 = vmatprep.subr.bf16.mxu0 0
        %1732 = vmatpush1.bf16.msra.mxu0 0
        %1733 = vmatprep.subr.bf16.mxu0 0
        %1734 = vmatpush1.bf16.msra.mxu0 %v1717
        %1735 = vmatprep.subr.bf16.mxu0 0
        %1736 = vmatpush2.bf16.msra.mxu0 0
        %1737 = vmatprep.subr.bf16.mxu0 0
        %1738 = vmatpush2.bf16.msra.mxu0 0
        %1739 = vmatprep.subr.bf16.mxu0 0
        %1740 = vmatpush2.bf16.msra.mxu0 0
        %1741 = vmatprep.subr.bf16.mxu0 0
        %1742 = vmatpush2.bf16.msra.mxu0 0
        %1743 = vmatprep.subr.bf16.mxu0 0
        %1744 = vmatpush2.bf16.msra.mxu0 0
        %1745 = vmatprep.subr.bf16.mxu0 0
        %1746 = vmatpush2.bf16.msra.mxu0 0
        %1747 = vmatprep.subr.bf16.mxu0 0
        %1748 = vmatpush2.bf16.msra.mxu0 0
        %1749 = vmatprep.subr.bf16.mxu0 0
        %1750 = vmatpush2.bf16.msra.mxu0 0
        %1751 = vmatprep.mubr.bf16.mxu0 0
        %1752 = vmatmul.mubr.bf16.gmra.mxu0 %v1705
        %v1753 = vpop.f32.mrf.mxu0
        %v1754 = vadd.f32 %v1674, %v1753
        %v1755 = vpop.f32.mrf.mxu0
        %v1756 = vpop.f32.mrf.mxu0
        %v1757 = vadd.f32 %v1677, %v1756
        %v1758 = vpop.f32.mrf.mxu0
        %1759 = vmatprep.mubr.bf16.mxu0 0
        %1760 = vmatmul.mubr.bf16.gmra.mxu0 %v1708
        %v1761 = vpop.f32.mrf.mxu0
        %v1762 = vadd.f32 %v1682, %v1761
        %v1763 = vpop.f32.mrf.mxu0
        %v1764 = vpop.f32.mrf.mxu0
        %v1765 = vadd.f32 %v1685, %v1764
        %v1766 = vpop.f32.mrf.mxu0
        %1767 = vmatprep.mubr.bf16.mxu0 0
        %1768 = vmatmul.mubr.bf16.gmra.mxu0 %v1711
        %v1769 = vpop.f32.mrf.mxu0
        %v1770 = vadd.f32 %v1690, %v1769
        %v1771 = vpop.f32.mrf.mxu0
        %v1772 = vpop.f32.mrf.mxu0
        %v1773 = vadd.f32 %v1693, %v1772
        %v1774 = vpop.f32.mrf.mxu0
        %1775 = vmatprep.mubr.bf16.mxu0 0
        %1776 = vmatmul.mubr.bf16.gmra.mxu0 %v1714
        %v1777 = vpop.f32.mrf.mxu0
        %v1778 = vadd.f32 %v1698, %v1777
        %v1779 = vpop.f32.mrf.mxu0
        %v1780 = vpop.f32.mrf.mxu0
        %v1781 = vadd.f32 %v1701, %v1780
        %v1782 = vpop.f32.mrf.mxu0
        %1783 = vdwg.mxu0
        %v1784 = vld [vmem:[%s5] sm:$0x1]
        %v1786 = vlaneseq
        %v1787 = vshrl.u32 %v1786, 7
        %v1788 = vsub.s32 0, %v1787
        %v1789 = vrot.slane %v1784, %v1788
        %v1791 = vadd.f32 %v1754, %v1789
        %v1792 = vadd.f32 %v1757, %v1789
        %v1793 = vadd.f32 %v1762, %v1789
        %v1794 = vadd.f32 %v1765, %v1789
        %v1795 = vadd.f32 %v1770, %v1789
        %v1796 = vadd.f32 %v1773, %v1789
        %v1797 = vadd.f32 %v1778, %v1789
        %v1798 = vadd.f32 %v1781, %v1789
        %v1799 = vmul.f32 %v1791, 0.70710677
        %v1800 = vmul.f32 %v1792, 0.70710677
        %v1801 = vmul.f32 %v1793, 0.70710677
        %v1802 = vmul.f32 %v1794, 0.70710677
        %v1803 = vmul.f32 %v1795, 0.70710677
        %v1804 = vmul.f32 %v1796, 0.70710677
        %v1805 = vmul.f32 %v1797, 0.70710677
        %v1806 = vmul.f32 %v1798, 0.70710677
        %vm1807 = vcmp.ge.f32.partialorder %v1799, 0.0
        %vm1808 = vcmp.ge.f32.partialorder %v1800, 0.0
        %vm1809 = vcmp.ge.f32.partialorder %v1801, 0.0
        %vm1810 = vcmp.ge.f32.partialorder %v1802, 0.0
        %vm1811 = vcmp.ge.f32.partialorder %v1803, 0.0
        %vm1812 = vcmp.ge.f32.partialorder %v1804, 0.0
        %vm1813 = vcmp.ge.f32.partialorder %v1805, 0.0
        %vm1814 = vcmp.ge.f32.partialorder %v1806, 0.0
        %v1815 = vsel %vm1807, 1.0, -1.0
        %v1816 = vsel %vm1808, 1.0, -1.0
        %v1817 = vsel %vm1809, 1.0, -1.0
        %v1818 = vsel %vm1810, 1.0, -1.0
        %v1819 = vsel %vm1811, 1.0, -1.0
        %v1820 = vsel %vm1812, 1.0, -1.0
        %v1821 = vsel %vm1813, 1.0, -1.0
        %v1822 = vsel %vm1814, 1.0, -1.0
        %v1823 = vand.u32 2147483647, %v1799
        %v1824 = vand.u32 2147483647, %v1800
        %v1825 = vand.u32 2147483647, %v1801
        %v1826 = vand.u32 2147483647, %v1802
        %v1827 = vand.u32 2147483647, %v1803
        %v1828 = vand.u32 2147483647, %v1804
        %v1829 = vand.u32 2147483647, %v1805
        %v1830 = vand.u32 2147483647, %v1806
        %v1831 = vmul.f32 %v1823, 0.3275911
        %v1832 = vmul.f32 %v1824, 0.3275911
        %v1833 = vmul.f32 %v1825, 0.3275911
        %v1834 = vmul.f32 %v1826, 0.3275911
        %v1835 = vmul.f32 %v1827, 0.3275911
        %v1836 = vmul.f32 %v1828, 0.3275911
        %v1837 = vmul.f32 %v1829, 0.3275911
        %v1838 = vmul.f32 %v1830, 0.3275911
        %v1839 = vadd.f32 %v1831, 1.0
        %v1840 = vadd.f32 %v1832, 1.0
        %v1841 = vadd.f32 %v1833, 1.0
        %v1842 = vadd.f32 %v1834, 1.0
        %v1843 = vadd.f32 %v1835, 1.0
        %v1844 = vadd.f32 %v1836, 1.0
        %v1845 = vadd.f32 %v1837, 1.0
        %v1846 = vadd.f32 %v1838, 1.0
        %v1847 = vrcp.pop %v1839
        %v1848 = vrcp.pop %v1840
        %v1849 = vrcp.pop %v1841
        %v1850 = vrcp.pop %v1842
        %v1851 = vrcp.pop %v1843
        %v1852 = vrcp.pop %v1844
        %v1853 = vrcp.pop %v1845
        %v1854 = vrcp.pop %v1846
        %v1855 = vmul.f32 %v1839, %v1847
        %v1856 = vmul.f32 %v1840, %v1848
        %v1857 = vmul.f32 %v1841, %v1849
        %v1858 = vmul.f32 %v1842, %v1850
        %v1859 = vmul.f32 %v1843, %v1851
        %v1860 = vmul.f32 %v1844, %v1852
        %v1861 = vmul.f32 %v1845, %v1853
        %v1862 = vmul.f32 %v1846, %v1854
        %v1863 = vsub.f32 2.0, %v1855
        %v1864 = vsub.f32 2.0, %v1856
        %v1865 = vsub.f32 2.0, %v1857
        %v1866 = vsub.f32 2.0, %v1858
        %v1867 = vsub.f32 2.0, %v1859
        %v1868 = vsub.f32 2.0, %v1860
        %v1869 = vsub.f32 2.0, %v1861
        %v1870 = vsub.f32 2.0, %v1862
        %v1871 = vmul.f32 %v1847, %v1863
        %v1872 = vmul.f32 %v1848, %v1864
        %v1873 = vmul.f32 %v1849, %v1865
        %v1874 = vmul.f32 %v1850, %v1866
        %v1875 = vmul.f32 %v1851, %v1867
        %v1876 = vmul.f32 %v1852, %v1868
        %v1877 = vmul.f32 %v1853, %v1869
        %v1878 = vmul.f32 %v1854, %v1870
        %v1879 = vmul.f32 %v1871, 1.0614054
        %v1880 = vmul.f32 %v1872, 1.0614054
        %v1881 = vmul.f32 %v1873, 1.0614054
        %v1882 = vmul.f32 %v1874, 1.0614054
        %v1883 = vmul.f32 %v1875, 1.0614054
        %v1884 = vmul.f32 %v1876, 1.0614054
        %v1885 = vmul.f32 %v1877, 1.0614054
        %v1886 = vmul.f32 %v1878, 1.0614054
        %v1887 = vadd.f32 %v1879, -1.4531521
        %v1888 = vadd.f32 %v1880, -1.4531521
        %v1889 = vadd.f32 %v1881, -1.4531521
        %v1890 = vadd.f32 %v1882, -1.4531521
        %v1891 = vadd.f32 %v1883, -1.4531521
        %v1892 = vadd.f32 %v1884, -1.4531521
        %v1893 = vadd.f32 %v1885, -1.4531521
        %v1894 = vadd.f32 %v1886, -1.4531521
        %v1895 = vmul.f32 %v1887, %v1871
        %v1896 = vmul.f32 %v1888, %v1872
        %v1897 = vmul.f32 %v1889, %v1873
        %v1898 = vmul.f32 %v1890, %v1874
        %v1899 = vmul.f32 %v1891, %v1875
        %v1900 = vmul.f32 %v1892, %v1876
        %v1901 = vmul.f32 %v1893, %v1877
        %v1902 = vmul.f32 %v1894, %v1878
        %v1903 = vadd.f32 %v1895, 1.4214138
        %v1904 = vadd.f32 %v1896, 1.4214138
        %v1905 = vadd.f32 %v1897, 1.4214138
        %v1906 = vadd.f32 %v1898, 1.4214138
        %v1907 = vadd.f32 %v1899, 1.4214138
        %v1908 = vadd.f32 %v1900, 1.4214138
        %v1909 = vadd.f32 %v1901, 1.4214138
        %v1910 = vadd.f32 %v1902, 1.4214138
        %v1911 = vmul.f32 %v1903, %v1871
        %v1912 = vmul.f32 %v1904, %v1872
        %v1913 = vmul.f32 %v1905, %v1873
        %v1914 = vmul.f32 %v1906, %v1874
        %v1915 = vmul.f32 %v1907, %v1875
        %v1916 = vmul.f32 %v1908, %v1876
        %v1917 = vmul.f32 %v1909, %v1877
        %v1918 = vmul.f32 %v1910, %v1878
        %v1919 = vadd.f32 %v1911, -0.28449672
        %v1920 = vadd.f32 %v1912, -0.28449672
        %v1921 = vadd.f32 %v1913, -0.28449672
        %v1922 = vadd.f32 %v1914, -0.28449672
        %v1923 = vadd.f32 %v1915, -0.28449672
        %v1924 = vadd.f32 %v1916, -0.28449672
        %v1925 = vadd.f32 %v1917, -0.28449672
        %v1926 = vadd.f32 %v1918, -0.28449672
        %v1927 = vmul.f32 %v1919, %v1871
        %v1928 = vmul.f32 %v1920, %v1872
        %v1929 = vmul.f32 %v1921, %v1873
        %v1930 = vmul.f32 %v1922, %v1874
        %v1931 = vmul.f32 %v1923, %v1875
        %v1932 = vmul.f32 %v1924, %v1876
        %v1933 = vmul.f32 %v1925, %v1877
        %v1934 = vmul.f32 %v1926, %v1878
        %v1935 = vadd.f32 %v1927, 0.2548296
        %v1936 = vadd.f32 %v1928, 0.2548296
        %v1937 = vadd.f32 %v1929, 0.2548296
        %v1938 = vadd.f32 %v1930, 0.2548296
        %v1939 = vadd.f32 %v1931, 0.2548296
        %v1940 = vadd.f32 %v1932, 0.2548296
        %v1941 = vadd.f32 %v1933, 0.2548296
        %v1942 = vadd.f32 %v1934, 0.2548296
        %v1943 = vmul.f32 %v1935, %v1871
        %v1944 = vmul.f32 %v1936, %v1872
        %v1945 = vmul.f32 %v1937, %v1873
        %v1946 = vmul.f32 %v1938, %v1874
        %v1947 = vmul.f32 %v1939, %v1875
        %v1948 = vmul.f32 %v1940, %v1876
        %v1949 = vmul.f32 %v1941, %v1877
        %v1950 = vmul.f32 %v1942, %v1878
        %v1951 = vsub.f32 0.0, %v1823
        %v1952 = vsub.f32 0.0, %v1824
        %v1953 = vsub.f32 0.0, %v1825
        %v1954 = vsub.f32 0.0, %v1826
        %v1955 = vsub.f32 0.0, %v1827
        %v1956 = vsub.f32 0.0, %v1828
        %v1957 = vsub.f32 0.0, %v1829
        %v1958 = vsub.f32 0.0, %v1830
        %v1959 = vmul.f32 %v1951, %v1823
        %v1960 = vmul.f32 %v1952, %v1824
        %v1961 = vmul.f32 %v1953, %v1825
        %v1962 = vmul.f32 %v1954, %v1826
        %v1963 = vmul.f32 %v1955, %v1827
        %v1964 = vmul.f32 %v1956, %v1828
        %v1965 = vmul.f32 %v1957, %v1829
        %v1966 = vmul.f32 %v1958, %v1830
        %v1967 = vmul.f32 %v1959, 1.442695
        %v1968 = vpow.pop %v1967
        %v1969 = vmul.f32 %v1960, 1.442695
        %v1970 = vpow.pop %v1969
        %v1971 = vmul.f32 %v1961, 1.442695
        %v1972 = vpow.pop %v1971
        %v1973 = vmul.f32 %v1962, 1.442695
        %v1974 = vpow.pop %v1973
        %v1975 = vmul.f32 %v1963, 1.442695
        %v1976 = vpow.pop %v1975
        %v1977 = vmul.f32 %v1964, 1.442695
        %v1978 = vpow.pop %v1977
        %v1979 = vmul.f32 %v1965, 1.442695
        %v1980 = vpow.pop %v1979
        %v1981 = vmul.f32 %v1966, 1.442695
        %v1982 = vpow.pop %v1981
        %v1983 = vmul.f32 %v1943, %v1968
        %v1984 = vmul.f32 %v1944, %v1970
        %v1985 = vmul.f32 %v1945, %v1972
        %v1986 = vmul.f32 %v1946, %v1974
        %v1987 = vmul.f32 %v1947, %v1976
        %v1988 = vmul.f32 %v1948, %v1978
        %v1989 = vmul.f32 %v1949, %v1980
        %v1990 = vmul.f32 %v1950, %v1982
        %v1991 = vsub.f32 1.0, %v1983
        %v1992 = vsub.f32 1.0, %v1984
        %v1993 = vsub.f32 1.0, %v1985
        %v1994 = vsub.f32 1.0, %v1986
        %v1995 = vsub.f32 1.0, %v1987
        %v1996 = vsub.f32 1.0, %v1988
        %v1997 = vsub.f32 1.0, %v1989
        %v1998 = vsub.f32 1.0, %v1990
        %v1999 = vmul.f32 %v1815, %v1991
        %v2000 = vmul.f32 %v1816, %v1992
        %v2001 = vmul.f32 %v1817, %v1993
        %v2002 = vmul.f32 %v1818, %v1994
        %v2003 = vmul.f32 %v1819, %v1995
        %v2004 = vmul.f32 %v1820, %v1996
        %v2005 = vmul.f32 %v1821, %v1997
        %v2006 = vmul.f32 %v1822, %v1998
        %v2007 = vmul.f32 %v1791, 0.5
        %v2008 = vmul.f32 %v1792, 0.5
        %v2009 = vmul.f32 %v1793, 0.5
        %v2010 = vmul.f32 %v1794, 0.5
        %v2011 = vmul.f32 %v1795, 0.5
        %v2012 = vmul.f32 %v1796, 0.5
        %v2013 = vmul.f32 %v1797, 0.5
        %v2014 = vmul.f32 %v1798, 0.5
        %v2015 = vadd.f32 %v1999, 1.0
        %v2016 = vadd.f32 %v2000, 1.0
        %v2017 = vadd.f32 %v2001, 1.0
        %v2018 = vadd.f32 %v2002, 1.0
        %v2019 = vadd.f32 %v2003, 1.0
        %v2020 = vadd.f32 %v2004, 1.0
        %v2021 = vadd.f32 %v2005, 1.0
        %v2022 = vadd.f32 %v2006, 1.0
        %v2023 = vmul.f32 %v2007, %v2015
        %v2024 = vmul.f32 %v2008, %v2016
        %v2025 = vmul.f32 %v2009, %v2017
        %v2026 = vmul.f32 %v2010, %v2018
        %v2027 = vmul.f32 %v2011, %v2019
        %v2028 = vmul.f32 %v2012, %v2020
        %v2029 = vmul.f32 %v2013, %v2021
        %v2030 = vmul.f32 %v2014, %v2022
        %v2031 = vpack.c.bf16 %v2024, %v2023
        %v2032 = vpack.c.bf16 %v2026, %v2025
        %v2033 = vpack.c.bf16 %v2028, %v2027
        %v2034 = vpack.c.bf16 %v2030, %v2029
        %v2035 = vld [vmem:[%s6] sm:$0xf]
        %v2036 = vld [vmem:[%s6 + $0x4] sm:$0xf]
        %v2037 = vld [vmem:[%s6 + $0x8] sm:$0xf]
        %v2038 = vld [vmem:[%s6 + $0xc] sm:$0xf]
        %v2043 = vunpack.c.l.b16 %v2035
        %v2044 = vunpack.c.l.b16 %v2036
        %v2045 = vunpack.c.l.b16 %v2037
        %v2046 = vunpack.c.l.b16 %v2038
        %v2047 = vpack.c.b16 %v2044, %v2043
        %v2048 = vpack.c.b16 %v2046, %v2045
        %vm2051 = vcmask 261120
        %v2053 = vsel %vm2051, %v2031, 0
        %v2056 = vsel %vm2051, %v2032, 0
        %v2059 = vsel %vm2051, %v2033, 0
        %v2062 = vsel %vm2051, %v2034, 0
        %2064 = vmatprep.subr.bf16.mxu0 0
        %2065 = vmatpush1.bf16.msra.mxu0 0
        %2066 = vmatprep.subr.bf16.mxu0 0
        %2067 = vmatpush1.bf16.msra.mxu0 0
        %2068 = vmatprep.subr.bf16.mxu0 0
        %2069 = vmatpush1.bf16.msra.mxu0 0
        %2070 = vmatprep.subr.bf16.mxu0 0
        %2071 = vmatpush1.bf16.msra.mxu0 0
        %2072 = vmatprep.subr.bf16.mxu0 0
        %2073 = vmatpush1.bf16.msra.mxu0 0
        %2074 = vmatprep.subr.bf16.mxu0 0
        %2075 = vmatpush1.bf16.msra.mxu0 0
        %2076 = vmatprep.subr.bf16.mxu0 0
        %2077 = vmatpush1.bf16.msra.mxu0 %v2048
        %2078 = vmatprep.subr.bf16.mxu0 0
        %2079 = vmatpush1.bf16.msra.mxu0 %v2047
        %2080 = vmatprep.subr.bf16.mxu0 0
        %2081 = vmatpush2.bf16.msra.mxu0 0
        %2082 = vmatprep.subr.bf16.mxu0 0
        %2083 = vmatpush2.bf16.msra.mxu0 0
        %2084 = vmatprep.subr.bf16.mxu0 0
        %2085 = vmatpush2.bf16.msra.mxu0 0
        %2086 = vmatprep.subr.bf16.mxu0 0
        %2087 = vmatpush2.bf16.msra.mxu0 0
        %2088 = vmatprep.subr.bf16.mxu0 0
        %2089 = vmatpush2.bf16.msra.mxu0 0
        %2090 = vmatprep.subr.bf16.mxu0 0
        %2091 = vmatpush2.bf16.msra.mxu0 0
        %2092 = vmatprep.subr.bf16.mxu0 0
        %2093 = vmatpush2.bf16.msra.mxu0 0
        %2094 = vmatprep.subr.bf16.mxu0 0
        %2095 = vmatpush2.bf16.msra.mxu0 0
        %2096 = vmatprep.mubr.bf16.mxu0 0
        %2097 = vmatmul.mubr.bf16.gmra.mxu0 %v2053
        %v2098 = vpop.f32.mrf.mxu0
        %v2099 = vadd.f32 0.0, %v2098
        %v2100 = vpop.f32.mrf.mxu0
        %v2101 = vpop.f32.mrf.mxu0
        %v2102 = vadd.f32 0.0, %v2101
        %v2103 = vpop.f32.mrf.mxu0
        %2104 = vmatprep.mubr.bf16.mxu0 0
        %2105 = vmatmul.mubr.bf16.gmra.mxu0 %v2056
        %v2106 = vpop.f32.mrf.mxu0
        %v2107 = vadd.f32 0.0, %v2106
        %v2108 = vpop.f32.mrf.mxu0
        %v2109 = vpop.f32.mrf.mxu0
        %v2110 = vadd.f32 0.0, %v2109
        %v2111 = vpop.f32.mrf.mxu0
        %2112 = vmatprep.mubr.bf16.mxu0 0
        %2113 = vmatmul.mubr.bf16.gmra.mxu0 %v2059
        %v2114 = vpop.f32.mrf.mxu0
        %v2115 = vadd.f32 0.0, %v2114
        %v2116 = vpop.f32.mrf.mxu0
        %v2117 = vpop.f32.mrf.mxu0
        %v2118 = vadd.f32 0.0, %v2117
        %v2119 = vpop.f32.mrf.mxu0
        %2120 = vmatprep.mubr.bf16.mxu0 0
        %2121 = vmatmul.mubr.bf16.gmra.mxu0 %v2062
        %v2122 = vpop.f32.mrf.mxu0
        %v2123 = vadd.f32 0.0, %v2122
        %v2124 = vpop.f32.mrf.mxu0
        %v2125 = vpop.f32.mrf.mxu0
        %v2126 = vadd.f32 0.0, %v2125
        %v2127 = vpop.f32.mrf.mxu0
        %2128 = vdwg.mxu0
        %v2129 = vadd.f32 %v301, %v2099
        %v2130 = vadd.f32 %v302, %v2102
        %v2131 = vadd.f32 %v303, %v2107
        %v2132 = vadd.f32 %v304, %v2110
        %v2133 = vadd.f32 %v305, %v2115
        %v2134 = vadd.f32 %v306, %v2118
        %v2135 = vadd.f32 %v307, %v2123
        %v2136 = vadd.f32 %v308, %v2126
        %2137 = vst.msk [vmem:[%s287] sm:$0xff] %vm1626, %v2129
        %2138 = vst.msk [vmem:[%s287 + $0x8] sm:$0xff] %vm1626, %v2130
        %2139 = vst.msk [vmem:[%s287 + $0x10] sm:$0xff] %vm1626, %v2131
        %2140 = vst.msk [vmem:[%s287 + $0x18] sm:$0xff] %vm1626, %v2132
        %2141 = vst.msk [vmem:[%s287 + $0x20] sm:$0xff] %vm1626, %v2133
        %2142 = vst.msk [vmem:[%s287 + $0x28] sm:$0xff] %vm1626, %v2134
        %2143 = vst.msk [vmem:[%s287 + $0x30] sm:$0xff] %vm1626, %v2135
        %2144 = vst.msk [vmem:[%s287 + $0x38] sm:$0xff] %vm1626, %v2136
        %s2145 = sand.u32 %s186, 1
        %s2146 = scalar_lea.sflag [#allocation3], %s2145
        %s2147 = sand.u32 %s186, 1
        %s2148 = smul.addr %s2147, 64
        %s2149 = scalar_lea.vmem [#allocation2], %s2148
        // Predicated region
        $region49: #{fasternet_block.1} parent=47 // pred_check
          %p2150 = pneg %p196
        $region50: #{fasternet_block.1} parent=47 // pred_check_branch
          %2152 = sbr.rel (%p2150) target = $region52
        $region51: #{fasternet_block.1} parent=47 // pred_region
          %s2153 = smul.u32 8, %s21
          %s2155 = ssub.s32 1024, 1024
          %2156 = vsyncadd %s2146, %s2155
          %s2157 = smul.addr %s2153, 128
          %s2158 = scalar_lea.hbm %s7, %s2157
          %s2159 = sshll.u32 %s2149, 4
          %s2160 = int_to_ptr.vmem [resolvable:$true] %s2159
          %2165 = dma.vmem_to_hbm [thread:$0]  %s2160, 1024, %s2158, %s2146, 128, 128, 8
        $region52: #{fasternet_block.1} parent=47 // pred_fallthru
          _
      $region48: #{fasternet_block.1} parent=5 // pred_fallthru
        _
      %p2166 = scmp.le.s32.totalorder 2, %s16
      // Predicated region
      $region53: #{fasternet_block.1} parent=5 // pred_check
        %p2167 = pneg %p2166
      $region54: #{fasternet_block.1} parent=5 // pred_check_branch
        %2169 = sbr.rel (%p2167) target = $region56
      $region55: #{fasternet_block.1} parent=5 // pred_region
        %s2170 = ssub.s32 %s16, 2
        // Predicated region
        $region57: #{fasternet_block.1} parent=55 // pred_check
          %p2171 = pneg %p202
        $region58: #{fasternet_block.1} parent=55 // pred_check_branch
          %2173 = sbr.rel (%p2171) target = $region60
        $region59: #{fasternet_block.1} parent=55 // pred_region
          %s2174 = sand.u32 %s187, 1
          %s2175 = scalar_lea.sflag [#allocation3], %s2174
          %s2176 = sand.u32 %s187, 1
          %s2177 = smul.addr %s2176, 64
          %s2178 = scalar_lea.vmem [#allocation2], %s2177
          %2179 = dma.done %s2175, 1024
        $region60: #{fasternet_block.1} parent=55 // pred_fallthru
          _
      $region56: #{fasternet_block.1} parent=5 // pred_fallthru
        _
    $region6: #{fasternet_block.1} parent=1 // loop_footer
      %s20 = sadd.s32 1, %s16
    $region7: #{fasternet_block.1} parent=1 // loop_footer_branch
      %15 = sbr.rel target = $region3
    $region8: #{fasternet_block.1} parent=1 // loop_exit
      _
    %2180 = vsyncpa [#allocation3], 1
    %s2181 = scalar_lea.sflag [#allocation3], 1
    %2182 = vsyncpa %s2181, 1

</llo_original>
